<compile_context>
chip_gen: v5e
topology: v5e:2x2
jax: 0.10.0
libtpu: 0.0.40
codegen_flags: <defaults>
</compile_context>

<pallas_src>
import functools

import jax
import jax.numpy as jnp
from jax.experimental import pallas as pl
from jax.experimental.pallas import tpu as pltpu


def _attention_aggregator_kernel(
    x_ref,        # (B_blk, S, D_in)
    w_proj_ref,   # (D_in, H)          proj.weight, pre-transposed
    b_proj_ref,   # (1, H)
    w_qkv_ref,    # (3, nh, H, hd)     in_proj_weight, pre-transposed, split per head
    b_qkv_ref,    # (3, nh, 1, hd)
    w_out_ref,    # (nh, hd, H)        out_proj.weight, pre-transposed, split per head
    b_out_ref,    # (1, H)
    o_ref,        # (B_blk, H)
    *, num_heads: int, head_dim: int,
):
    x = x_ref[...]                                   # (B_blk, S, D_in)
    b_blk, seq, d_in = x.shape
    hidden = w_proj_ref.shape[1]
    scale = 1.0 / (head_dim ** 0.5)
    inv_seq = 1.0 / seq

    # --- input projection on the flattened (B_blk*S, D_in) slab: one MXU op ---
    xf = x.reshape(b_blk * seq, d_in)
    h = jnp.dot(xf, w_proj_ref[...], preferred_element_type=jnp.float32)
    h = h + b_proj_ref[...]                          # (B_blk*S, H)

    # Small, tiny weight slabs: load once as values, index statically.
    w_qkv = w_qkv_ref[...]                           # (3, nh, H, hd)
    b_qkv = b_qkv_ref[...]                           # (3, nh, 1, hd)
    w_out = w_out_ref[...]                           # (nh, hd, H)

    # --- per-head attention, batched over the folded-in batch dimension ---
    # Heads are handled via per-head weight slabs (no sub-lane activation
    # slicing, no lane-dim concat).  The out-projection is applied AFTER the
    # sequence mean (algebraically identical).
    acc = jnp.zeros((b_blk, hidden), jnp.float32)
    for n in range(num_heads):                       # nh is small & static -> unrolled
        q = jnp.dot(h, w_qkv[0, n], preferred_element_type=jnp.float32) + b_qkv[0, n]
        k = jnp.dot(h, w_qkv[1, n], preferred_element_type=jnp.float32) + b_qkv[1, n]
        v = jnp.dot(h, w_qkv[2, n], preferred_element_type=jnp.float32) + b_qkv[2, n]
        q3 = q.reshape(b_blk, seq, head_dim) * scale
        k3 = k.reshape(b_blk, seq, head_dim)
        v3 = v.reshape(b_blk, seq, head_dim)

        # NOTE: for large S, tile the KV axis flash-style (online softmax)
        # instead of materializing the full (B_blk, S, S) score tensor.
        s = jnp.einsum("bqd,bkd->bqk", q3, k3,
                       preferred_element_type=jnp.float32)      # (B_blk, S, S)
        s = s - jnp.max(s, axis=-1, keepdims=True)
        p = jnp.exp(s)
        denom = jnp.sum(p, axis=-1, keepdims=True)
        p = p * pl.reciprocal(denom, approx=True)                # EUP, not VALU

        ctx = jnp.einsum("bqk,bkd->bqd", p, v3,
                         preferred_element_type=jnp.float32)     # (B_blk, S, hd)
        ctx_mean = jnp.sum(ctx, axis=1) * inv_seq                # (B_blk, hd)

        # out-projection of this head's slice, applied post-mean.
        acc = acc + jnp.dot(ctx_mean, w_out[n],
                            preferred_element_type=jnp.float32)  # (B_blk, H)

    o_ref[...] = acc + b_out_ref[...]


def attention_aggregator(x, params, *, num_heads: int, batch_block: int | None = None):
    """x: (B, S, D_in) float32 -> (B, H) float32."""
    B, S, D_in = x.shape
    H = params["proj_w"].shape[0]
    assert H % num_heads == 0
    hd = H // num_heads

    # Default: fold the whole batch into a single block (grid of 1) -- the
    # per-grid-step overhead dominates at small shapes.  On v7x (2 TCs) with a
    # large, sublane-aligned B, pass batch_block = B // 2 to split across cores.
    if batch_block is None:
        batch_block = B
    assert B % batch_block == 0
    assert batch_block == B or batch_block % 8 == 0, \
        "partial-batch output tiles must be sublane (8) aligned"
    n_blocks = B // batch_block

    # --- weight preparation (plain JAX glue) ---
    w_proj = params["proj_w"].T                                   # (D_in, H)
    b_proj = params["proj_b"].reshape(1, H)

    # in_proj_weight (3H, H) -> transposed (H, 3H) -> (3, nh, H, hd)
    w_qkv = params["in_proj_w"].T.reshape(H, 3, num_heads, hd).transpose(1, 2, 0, 3)
    b_qkv = params["in_proj_b"].reshape(3, num_heads, 1, hd)

    # out_proj.weight (H, H) -> transposed (H, H) -> per-head rows (nh, hd, H)
    w_out = params["out_proj_w"].T.reshape(num_heads, hd, H)
    b_out = params["out_proj_b"].reshape(1, H)

    kernel = functools.partial(_attention_aggregator_kernel,
                               num_heads=num_heads, head_dim=hd)

    out = pl.pallas_call(
        kernel,
        out_shape=jax.ShapeDtypeStruct((B, H), jnp.float32),
        grid_spec=pltpu.PrefetchScalarGridSpec(
            num_scalar_prefetch=0,
            grid=(n_blocks,),
            in_specs=[
                pl.BlockSpec((batch_block, S, D_in), lambda b: (b, 0, 0)),
                pl.BlockSpec((D_in, H), lambda b: (0, 0)),
                pl.BlockSpec((1, H), lambda b: (0, 0)),
                pl.BlockSpec((3, num_heads, H, hd), lambda b: (0, 0, 0, 0)),
                pl.BlockSpec((3, num_heads, 1, hd), lambda b: (0, 0, 0, 0)),
                pl.BlockSpec((num_heads, hd, H), lambda b: (0, 0, 0)),
                pl.BlockSpec((1, H), lambda b: (0, 0)),
            ],
            out_specs=pl.BlockSpec((batch_block, H), lambda b: (b, 0)),
        ),
        compiler_params=pltpu.CompilerParams(
            dimension_semantics=("parallel",),
            vmem_limit_bytes=32 * 1024 * 1024,
        ),
    )(x, w_proj, b_proj, w_qkv, b_qkv, w_out, b_out)
    return out


def _reference(x, params, *, num_heads: int):
    """Pure-JAX reference of the PyTorch forward for validation."""
    H = params["proj_w"].shape[0]
    head_dim = H // num_heads
    h = x @ params["proj_w"].T + params["proj_b"]
    qkv = h @ params["in_proj_w"].T + params["in_proj_b"]
    q, k, v = qkv[..., :H], qkv[..., H:2 * H], qkv[..., 2 * H:]

    def split(t):  # (B,S,H) -> (B,nh,S,hd)
        B, S, _ = t.shape
        return t.reshape(B, S, num_heads, head_dim).transpose(0, 2, 1, 3)

    qh, kh, vh = split(q), split(k), split(v)
    s = (qh / (head_dim ** 0.5)) @ kh.transpose(0, 1, 3, 2)
    p = jax.nn.softmax(s, axis=-1)
    o = p @ vh                                              # (B,nh,S,hd)
    o = o.transpose(0, 2, 1, 3).reshape(x.shape[0], x.shape[1], H)
    o = o @ params["out_proj_w"].T + params["out_proj_b"]
    return o.mean(axis=1)


def init_params(key, input_dim, hidden_dim):
    ks = jax.random.split(key, 6)
    s_proj = 1.0 / (input_dim ** 0.5)
    s_h = 1.0 / (hidden_dim ** 0.5)
    return {
        # nn.Linear(input_dim, hidden_dim)
        "proj_w": jax.random.uniform(ks[0], (hidden_dim, input_dim),
                                     jnp.float32, -s_proj, s_proj),
        "proj_b": jax.random.uniform(ks[1], (hidden_dim,),
                                     jnp.float32, -s_proj, s_proj),
        # nn.MultiheadAttention in_proj (3H, H) + bias (3H,)
        "in_proj_w": jax.random.uniform(ks[2], (3 * hidden_dim, hidden_dim),
                                        jnp.float32, -s_h, s_h),
        "in_proj_b": jax.random.uniform(ks[3], (3 * hidden_dim,),
                                        jnp.float32, -s_h, s_h),
        # out_proj Linear(H, H)
        "out_proj_w": jax.random.uniform(ks[4], (hidden_dim, hidden_dim),
                                         jnp.float32, -s_h, s_h),
        "out_proj_b": jax.random.uniform(ks[5], (hidden_dim,),
                                         jnp.float32, -s_h, s_h),
    }


if __name__ == "__main__":
    B, S, D_IN, HIDDEN, HEADS = 2, 8, 32, 32, 4

    key = jax.random.PRNGKey(0)
    k_x, k_p = jax.random.split(key)
    x = jax.random.normal(k_x, (B, S, D_IN), dtype=jnp.float32)
    params = init_params(k_p, D_IN, HIDDEN)

    out = attention_aggregator(x, params, num_heads=HEADS)
    out = jax.block_until_ready(out)

    ref = _reference(x, params, num_heads=HEADS)
    assert out.shape == (B, HIDDEN)
    # tolerance loosened slightly vs 1e-5 because the softmax denominator uses
    # the EUP approximate reciprocal (pl.reciprocal(..., approx=True)).
    assert jnp.allclose(out, ref, atol=2e-3, rtol=2e-3), "mismatch vs reference"

    print("KERNEL_OK")
</pallas_src>

<mosaic_0001>
module attributes {stable_mosaic.version = 11 : i64} {
  func.func @_attention_aggregator_kernel(%arg0: i32, %arg1: memref<2x8x32xf32, #tpu.memory_space<vmem>>, %arg2: memref<32x32xf32, #tpu.memory_space<vmem>>, %arg3: memref<1x32xf32, #tpu.memory_space<vmem>>, %arg4: memref<3x4x32x8xf32, #tpu.memory_space<vmem>>, %arg5: memref<3x4x1x8xf32, #tpu.memory_space<vmem>>, %arg6: memref<4x8x32xf32, #tpu.memory_space<vmem>>, %arg7: memref<1x32xf32, #tpu.memory_space<vmem>>, %arg8: memref<2x32xf32, #tpu.memory_space<vmem>>) attributes {dimension_semantics = [#tpu.dimension_semantics<parallel>], iteration_bounds = array<i64: 1>, scalar_prefetch = 0 : i64, scratch_operands = 0 : i64, tpu.core_type = #tpu.core_type<tc>, window_params = [{transform_indices = @transform_0, window_bounds = array<i64: 2, 8, 32>}, {pipeline_mode = #tpu.pipeline_mode<synchronous>, transform_indices = @transform_1, window_bounds = array<i64: 32, 32>}, {pipeline_mode = #tpu.pipeline_mode<synchronous>, transform_indices = @transform_2, window_bounds = array<i64: 1, 32>}, {pipeline_mode = #tpu.pipeline_mode<synchronous>, transform_indices = @transform_3, window_bounds = array<i64: 3, 4, 32, 8>}, {pipeline_mode = #tpu.pipeline_mode<synchronous>, transform_indices = @transform_4, window_bounds = array<i64: 3, 4, 1, 8>}, {pipeline_mode = #tpu.pipeline_mode<synchronous>, transform_indices = @transform_5, window_bounds = array<i64: 4, 8, 32>}, {pipeline_mode = #tpu.pipeline_mode<synchronous>, transform_indices = @transform_6, window_bounds = array<i64: 1, 32>}, {transform_indices = @transform_7, window_bounds = array<i64: 2, 32>}]} {
    %c0 = arith.constant 0 : index
    %c0_0 = arith.constant 0 : index
    %c0_1 = arith.constant 0 : index
    %0 = vector.load %arg1[%c0, %c0_0, %c0_1] : memref<2x8x32xf32, #tpu.memory_space<vmem>>, vector<2x8x32xf32>
    %1 = vector.shape_cast %0 : vector<2x8x32xf32> to vector<16x32xf32>
    %c0_2 = arith.constant 0 : index
    %c0_3 = arith.constant 0 : index
    %2 = vector.load %arg2[%c0_2, %c0_3] : memref<32x32xf32, #tpu.memory_space<vmem>>, vector<32x32xf32>
    %cst = arith.constant dense<0.000000e+00> : vector<16x32xf32>
    %3 = tpu.matmul %1, %2, %cst {dimension_numbers = #tpu.dot_dimension_numbers<[1], [0], [0], [1], [0, 0, 1, 1], [], []>} : vector<16x32xf32>, vector<32x32xf32>, vector<16x32xf32> -> vector<16x32xf32>
    %c0_4 = arith.constant 0 : index
    %c0_5 = arith.constant 0 : index
    %4 = vector.load %arg3[%c0_4, %c0_5] : memref<1x32xf32, #tpu.memory_space<vmem>>, vector<1x32xf32>
    %5 = vector.broadcast %4 : vector<1x32xf32> to vector<16x32xf32>
    %6 = arith.addf %3, %5 : vector<16x32xf32>
    %c0_6 = arith.constant 0 : index
    %c0_7 = arith.constant 0 : index
    %c0_8 = arith.constant 0 : index
    %c0_9 = arith.constant 0 : index
    %7 = vector.load %arg4[%c0_6, %c0_7, %c0_8, %c0_9] : memref<3x4x32x8xf32, #tpu.memory_space<vmem>>, vector<3x4x32x8xf32>
    %c0_10 = arith.constant 0 : index
    %c0_11 = arith.constant 0 : index
    %c0_12 = arith.constant 0 : index
    %c0_13 = arith.constant 0 : index
    %8 = vector.load %arg5[%c0_10, %c0_11, %c0_12, %c0_13] : memref<3x4x1x8xf32, #tpu.memory_space<vmem>>, vector<3x4x1x8xf32>
    %c0_14 = arith.constant 0 : index
    %c0_15 = arith.constant 0 : index
    %c0_16 = arith.constant 0 : index
    %9 = vector.load %arg6[%c0_14, %c0_15, %c0_16] : memref<4x8x32xf32, #tpu.memory_space<vmem>>, vector<4x8x32xf32>
    %cst_17 = arith.constant 0.000000e+00 : f32
    %10 = vector.broadcast %cst_17 : f32 to vector<2x32xf32>
    %11 = vector.extract_strided_slice %7 {offsets = [0, 0, 0, 0], sizes = [1, 1, 32, 8], strides = [1, 1, 1, 1]} : vector<3x4x32x8xf32> to vector<1x1x32x8xf32>
    %12 = vector.shape_cast %11 : vector<1x1x32x8xf32> to vector<32x8xf32>
    %cst_18 = arith.constant dense<0.000000e+00> : vector<16x8xf32>
    %13 = tpu.matmul %6, %12, %cst_18 {dimension_numbers = #tpu.dot_dimension_numbers<[1], [0], [0], [1], [0, 0, 1, 1], [], []>} : vector<16x32xf32>, vector<32x8xf32>, vector<16x8xf32> -> vector<16x8xf32>
    %14 = vector.extract_strided_slice %8 {offsets = [0, 0, 0, 0], sizes = [1, 1, 1, 8], strides = [1, 1, 1, 1]} : vector<3x4x1x8xf32> to vector<1x1x1x8xf32>
    %15 = vector.shape_cast %14 : vector<1x1x1x8xf32> to vector<1x8xf32>
    %16 = vector.broadcast %15 : vector<1x8xf32> to vector<16x8xf32>
    %17 = arith.addf %13, %16 : vector<16x8xf32>
    %18 = vector.extract_strided_slice %7 {offsets = [1, 0, 0, 0], sizes = [1, 1, 32, 8], strides = [1, 1, 1, 1]} : vector<3x4x32x8xf32> to vector<1x1x32x8xf32>
    %19 = vector.shape_cast %18 : vector<1x1x32x8xf32> to vector<32x8xf32>
    %cst_19 = arith.constant dense<0.000000e+00> : vector<16x8xf32>
    %20 = tpu.matmul %6, %19, %cst_19 {dimension_numbers = #tpu.dot_dimension_numbers<[1], [0], [0], [1], [0, 0, 1, 1], [], []>} : vector<16x32xf32>, vector<32x8xf32>, vector<16x8xf32> -> vector<16x8xf32>
    %21 = vector.extract_strided_slice %8 {offsets = [1, 0, 0, 0], sizes = [1, 1, 1, 8], strides = [1, 1, 1, 1]} : vector<3x4x1x8xf32> to vector<1x1x1x8xf32>
    %22 = vector.shape_cast %21 : vector<1x1x1x8xf32> to vector<1x8xf32>
    %23 = vector.broadcast %22 : vector<1x8xf32> to vector<16x8xf32>
    %24 = arith.addf %20, %23 : vector<16x8xf32>
    %25 = vector.extract_strided_slice %7 {offsets = [2, 0, 0, 0], sizes = [1, 1, 32, 8], strides = [1, 1, 1, 1]} : vector<3x4x32x8xf32> to vector<1x1x32x8xf32>
    %26 = vector.shape_cast %25 : vector<1x1x32x8xf32> to vector<32x8xf32>
    %cst_20 = arith.constant dense<0.000000e+00> : vector<16x8xf32>
    %27 = tpu.matmul %6, %26, %cst_20 {dimension_numbers = #tpu.dot_dimension_numbers<[1], [0], [0], [1], [0, 0, 1, 1], [], []>} : vector<16x32xf32>, vector<32x8xf32>, vector<16x8xf32> -> vector<16x8xf32>
    %28 = vector.extract_strided_slice %8 {offsets = [2, 0, 0, 0], sizes = [1, 1, 1, 8], strides = [1, 1, 1, 1]} : vector<3x4x1x8xf32> to vector<1x1x1x8xf32>
    %29 = vector.shape_cast %28 : vector<1x1x1x8xf32> to vector<1x8xf32>
    %30 = vector.broadcast %29 : vector<1x8xf32> to vector<16x8xf32>
    %31 = arith.addf %27, %30 : vector<16x8xf32>
    %32 = vector.shape_cast %17 : vector<16x8xf32> to vector<2x8x8xf32>
    %cst_21 = arith.constant 0.353553385 : f32
    %33 = vector.broadcast %cst_21 : f32 to vector<2x8x8xf32>
    %34 = arith.mulf %32, %33 : vector<2x8x8xf32>
    %35 = vector.shape_cast %24 : vector<16x8xf32> to vector<2x8x8xf32>
    %36 = vector.shape_cast %31 : vector<16x8xf32> to vector<2x8x8xf32>
    "tpu.trace_start"() <{level = 10 : i32, message = "bqd,bkd->bqk"}> : () -> ()
    %cst_22 = arith.constant dense<0.000000e+00> : vector<2x8x8xf32>
    %37 = tpu.matmul %34, %35, %cst_22 {dimension_numbers = #tpu.dot_dimension_numbers<[2], [2], [1], [1], [0, 0, 0, 1, 1, 1], [0], [0]>} : vector<2x8x8xf32>, vector<2x8x8xf32>, vector<2x8x8xf32> -> vector<2x8x8xf32>
    "tpu.trace_stop"() : () -> ()
    %cst_23 = arith.constant dense<0xFF800000> : vector<2x8xf32>
    %38 = vector.multi_reduction <maximumf>, %37, %cst_23 [2] : vector<2x8x8xf32> to vector<2x8xf32>
    %39 = vector.shape_cast %38 : vector<2x8xf32> to vector<2x8x1xf32>
    %40 = vector.broadcast %39 : vector<2x8x1xf32> to vector<2x8x8xf32>
    %41 = arith.subf %37, %40 : vector<2x8x8xf32>
    %42 = math.exp %41 : vector<2x8x8xf32>
    %cst_24 = arith.constant dense<0.000000e+00> : vector<2x8xf32>
    %43 = vector.multi_reduction <add>, %42, %cst_24 [2] : vector<2x8x8xf32> to vector<2x8xf32>
    %44 = vector.shape_cast %43 : vector<2x8xf32> to vector<2x8x1xf32>
    %45 = tpu.reciprocal %44 {approx = true} : vector<2x8x1xf32> -> vector<2x8x1xf32>
    %46 = vector.broadcast %45 : vector<2x8x1xf32> to vector<2x8x8xf32>
    %47 = arith.mulf %42, %46 : vector<2x8x8xf32>
    "tpu.trace_start"() <{level = 10 : i32, message = "bqk,bkd->bqd"}> : () -> ()
    %cst_25 = arith.constant dense<0.000000e+00> : vector<2x8x8xf32>
    %48 = tpu.matmul %47, %36, %cst_25 {dimension_numbers = #tpu.dot_dimension_numbers<[2], [1], [1], [2], [0, 0, 0, 1, 1, 2], [0], [0]>} : vector<2x8x8xf32>, vector<2x8x8xf32>, vector<2x8x8xf32> -> vector<2x8x8xf32>
    "tpu.trace_stop"() : () -> ()
    %cst_26 = arith.constant dense<0.000000e+00> : vector<2x8xf32>
    %49 = vector.multi_reduction <add>, %48, %cst_26 [1] : vector<2x8x8xf32> to vector<2x8xf32>
    %cst_27 = arith.constant 1.250000e-01 : f32
    %50 = vector.broadcast %cst_27 : f32 to vector<2x8xf32>
    %51 = arith.mulf %49, %50 : vector<2x8xf32>
    %52 = vector.extract_strided_slice %9 {offsets = [0, 0, 0], sizes = [1, 8, 32], strides = [1, 1, 1]} : vector<4x8x32xf32> to vector<1x8x32xf32>
    %53 = vector.shape_cast %52 : vector<1x8x32xf32> to vector<8x32xf32>
    %cst_28 = arith.constant dense<0.000000e+00> : vector<2x32xf32>
    %54 = tpu.matmul %51, %53, %cst_28 {dimension_numbers = #tpu.dot_dimension_numbers<[1], [0], [0], [1], [0, 0, 1, 1], [], []>} : vector<2x8xf32>, vector<8x32xf32>, vector<2x32xf32> -> vector<2x32xf32>
    %55 = arith.addf %10, %54 : vector<2x32xf32>
    %56 = vector.extract_strided_slice %7 {offsets = [0, 1, 0, 0], sizes = [1, 1, 32, 8], strides = [1, 1, 1, 1]} : vector<3x4x32x8xf32> to vector<1x1x32x8xf32>
    %57 = vector.shape_cast %56 : vector<1x1x32x8xf32> to vector<32x8xf32>
    %cst_29 = arith.constant dense<0.000000e+00> : vector<16x8xf32>
    %58 = tpu.matmul %6, %57, %cst_29 {dimension_numbers = #tpu.dot_dimension_numbers<[1], [0], [0], [1], [0, 0, 1, 1], [], []>} : vector<16x32xf32>, vector<32x8xf32>, vector<16x8xf32> -> vector<16x8xf32>
    %59 = vector.extract_strided_slice %8 {offsets = [0, 1, 0, 0], sizes = [1, 1, 1, 8], strides = [1, 1, 1, 1]} : vector<3x4x1x8xf32> to vector<1x1x1x8xf32>
    %60 = vector.shape_cast %59 : vector<1x1x1x8xf32> to vector<1x8xf32>
    %61 = vector.broadcast %60 : vector<1x8xf32> to vector<16x8xf32>
    %62 = arith.addf %58, %61 : vector<16x8xf32>
    %63 = vector.extract_strided_slice %7 {offsets = [1, 1, 0, 0], sizes = [1, 1, 32, 8], strides = [1, 1, 1, 1]} : vector<3x4x32x8xf32> to vector<1x1x32x8xf32>
    %64 = vector.shape_cast %63 : vector<1x1x32x8xf32> to vector<32x8xf32>
    %cst_30 = arith.constant dense<0.000000e+00> : vector<16x8xf32>
    %65 = tpu.matmul %6, %64, %cst_30 {dimension_numbers = #tpu.dot_dimension_numbers<[1], [0], [0], [1], [0, 0, 1, 1], [], []>} : vector<16x32xf32>, vector<32x8xf32>, vector<16x8xf32> -> vector<16x8xf32>
    %66 = vector.extract_strided_slice %8 {offsets = [1, 1, 0, 0], sizes = [1, 1, 1, 8], strides = [1, 1, 1, 1]} : vector<3x4x1x8xf32> to vector<1x1x1x8xf32>
    %67 = vector.shape_cast %66 : vector<1x1x1x8xf32> to vector<1x8xf32>
    %68 = vector.broadcast %67 : vector<1x8xf32> to vector<16x8xf32>
    %69 = arith.addf %65, %68 : vector<16x8xf32>
    %70 = vector.extract_strided_slice %7 {offsets = [2, 1, 0, 0], sizes = [1, 1, 32, 8], strides = [1, 1, 1, 1]} : vector<3x4x32x8xf32> to vector<1x1x32x8xf32>
    %71 = vector.shape_cast %70 : vector<1x1x32x8xf32> to vector<32x8xf32>
    %cst_31 = arith.constant dense<0.000000e+00> : vector<16x8xf32>
    %72 = tpu.matmul %6, %71, %cst_31 {dimension_numbers = #tpu.dot_dimension_numbers<[1], [0], [0], [1], [0, 0, 1, 1], [], []>} : vector<16x32xf32>, vector<32x8xf32>, vector<16x8xf32> -> vector<16x8xf32>
    %73 = vector.extract_strided_slice %8 {offsets = [2, 1, 0, 0], sizes = [1, 1, 1, 8], strides = [1, 1, 1, 1]} : vector<3x4x1x8xf32> to vector<1x1x1x8xf32>
    %74 = vector.shape_cast %73 : vector<1x1x1x8xf32> to vector<1x8xf32>
    %75 = vector.broadcast %74 : vector<1x8xf32> to vector<16x8xf32>
    %76 = arith.addf %72, %75 : vector<16x8xf32>
    %77 = vector.shape_cast %62 : vector<16x8xf32> to vector<2x8x8xf32>
    %cst_32 = arith.constant 0.353553385 : f32
    %78 = vector.broadcast %cst_32 : f32 to vector<2x8x8xf32>
    %79 = arith.mulf %77, %78 : vector<2x8x8xf32>
    %80 = vector.shape_cast %69 : vector<16x8xf32> to vector<2x8x8xf32>
    %81 = vector.shape_cast %76 : vector<16x8xf32> to vector<2x8x8xf32>
    "tpu.trace_start"() <{level = 10 : i32, message = "bqd,bkd->bqk"}> : () -> ()
    %cst_33 = arith.constant dense<0.000000e+00> : vector<2x8x8xf32>
    %82 = tpu.matmul %79, %80, %cst_33 {dimension_numbers = #tpu.dot_dimension_numbers<[2], [2], [1], [1], [0, 0, 0, 1, 1, 1], [0], [0]>} : vector<2x8x8xf32>, vector<2x8x8xf32>, vector<2x8x8xf32> -> vector<2x8x8xf32>
    "tpu.trace_stop"() : () -> ()
    %cst_34 = arith.constant dense<0xFF800000> : vector<2x8xf32>
    %83 = vector.multi_reduction <maximumf>, %82, %cst_34 [2] : vector<2x8x8xf32> to vector<2x8xf32>
    %84 = vector.shape_cast %83 : vector<2x8xf32> to vector<2x8x1xf32>
    %85 = vector.broadcast %84 : vector<2x8x1xf32> to vector<2x8x8xf32>
    %86 = arith.subf %82, %85 : vector<2x8x8xf32>
    %87 = math.exp %86 : vector<2x8x8xf32>
    %cst_35 = arith.constant dense<0.000000e+00> : vector<2x8xf32>
    %88 = vector.multi_reduction <add>, %87, %cst_35 [2] : vector<2x8x8xf32> to vector<2x8xf32>
    %89 = vector.shape_cast %88 : vector<2x8xf32> to vector<2x8x1xf32>
    %90 = tpu.reciprocal %89 {approx = true} : vector<2x8x1xf32> -> vector<2x8x1xf32>
    %91 = vector.broadcast %90 : vector<2x8x1xf32> to vector<2x8x8xf32>
    %92 = arith.mulf %87, %91 : vector<2x8x8xf32>
    "tpu.trace_start"() <{level = 10 : i32, message = "bqk,bkd->bqd"}> : () -> ()
    %cst_36 = arith.constant dense<0.000000e+00> : vector<2x8x8xf32>
    %93 = tpu.matmul %92, %81, %cst_36 {dimension_numbers = #tpu.dot_dimension_numbers<[2], [1], [1], [2], [0, 0, 0, 1, 1, 2], [0], [0]>} : vector<2x8x8xf32>, vector<2x8x8xf32>, vector<2x8x8xf32> -> vector<2x8x8xf32>
    "tpu.trace_stop"() : () -> ()
    %cst_37 = arith.constant dense<0.000000e+00> : vector<2x8xf32>
    %94 = vector.multi_reduction <add>, %93, %cst_37 [1] : vector<2x8x8xf32> to vector<2x8xf32>
    %cst_38 = arith.constant 1.250000e-01 : f32
    %95 = vector.broadcast %cst_38 : f32 to vector<2x8xf32>
    %96 = arith.mulf %94, %95 : vector<2x8xf32>
    %97 = vector.extract_strided_slice %9 {offsets = [1, 0, 0], sizes = [1, 8, 32], strides = [1, 1, 1]} : vector<4x8x32xf32> to vector<1x8x32xf32>
    %98 = vector.shape_cast %97 : vector<1x8x32xf32> to vector<8x32xf32>
    %cst_39 = arith.constant dense<0.000000e+00> : vector<2x32xf32>
    %99 = tpu.matmul %96, %98, %cst_39 {dimension_numbers = #tpu.dot_dimension_numbers<[1], [0], [0], [1], [0, 0, 1, 1], [], []>} : vector<2x8xf32>, vector<8x32xf32>, vector<2x32xf32> -> vector<2x32xf32>
    %100 = arith.addf %55, %99 : vector<2x32xf32>
    %101 = vector.extract_strided_slice %7 {offsets = [0, 2, 0, 0], sizes = [1, 1, 32, 8], strides = [1, 1, 1, 1]} : vector<3x4x32x8xf32> to vector<1x1x32x8xf32>
    %102 = vector.shape_cast %101 : vector<1x1x32x8xf32> to vector<32x8xf32>
    %cst_40 = arith.constant dense<0.000000e+00> : vector<16x8xf32>
    %103 = tpu.matmul %6, %102, %cst_40 {dimension_numbers = #tpu.dot_dimension_numbers<[1], [0], [0], [1], [0, 0, 1, 1], [], []>} : vector<16x32xf32>, vector<32x8xf32>, vector<16x8xf32> -> vector<16x8xf32>
    %104 = vector.extract_strided_slice %8 {offsets = [0, 2, 0, 0], sizes = [1, 1, 1, 8], strides = [1, 1, 1, 1]} : vector<3x4x1x8xf32> to vector<1x1x1x8xf32>
    %105 = vector.shape_cast %104 : vector<1x1x1x8xf32> to vector<1x8xf32>
    %106 = vector.broadcast %105 : vector<1x8xf32> to vector<16x8xf32>
    %107 = arith.addf %103, %106 : vector<16x8xf32>
    %108 = vector.extract_strided_slice %7 {offsets = [1, 2, 0, 0], sizes = [1, 1, 32, 8], strides = [1, 1, 1, 1]} : vector<3x4x32x8xf32> to vector<1x1x32x8xf32>
    %109 = vector.shape_cast %108 : vector<1x1x32x8xf32> to vector<32x8xf32>
    %cst_41 = arith.constant dense<0.000000e+00> : vector<16x8xf32>
    %110 = tpu.matmul %6, %109, %cst_41 {dimension_numbers = #tpu.dot_dimension_numbers<[1], [0], [0], [1], [0, 0, 1, 1], [], []>} : vector<16x32xf32>, vector<32x8xf32>, vector<16x8xf32> -> vector<16x8xf32>
    %111 = vector.extract_strided_slice %8 {offsets = [1, 2, 0, 0], sizes = [1, 1, 1, 8], strides = [1, 1, 1, 1]} : vector<3x4x1x8xf32> to vector<1x1x1x8xf32>
    %112 = vector.shape_cast %111 : vector<1x1x1x8xf32> to vector<1x8xf32>
    %113 = vector.broadcast %112 : vector<1x8xf32> to vector<16x8xf32>
    %114 = arith.addf %110, %113 : vector<16x8xf32>
    %115 = vector.extract_strided_slice %7 {offsets = [2, 2, 0, 0], sizes = [1, 1, 32, 8], strides = [1, 1, 1, 1]} : vector<3x4x32x8xf32> to vector<1x1x32x8xf32>
    %116 = vector.shape_cast %115 : vector<1x1x32x8xf32> to vector<32x8xf32>
    %cst_42 = arith.constant dense<0.000000e+00> : vector<16x8xf32>
    %117 = tpu.matmul %6, %116, %cst_42 {dimension_numbers = #tpu.dot_dimension_numbers<[1], [0], [0], [1], [0, 0, 1, 1], [], []>} : vector<16x32xf32>, vector<32x8xf32>, vector<16x8xf32> -> vector<16x8xf32>
    %118 = vector.extract_strided_slice %8 {offsets = [2, 2, 0, 0], sizes = [1, 1, 1, 8], strides = [1, 1, 1, 1]} : vector<3x4x1x8xf32> to vector<1x1x1x8xf32>
    %119 = vector.shape_cast %118 : vector<1x1x1x8xf32> to vector<1x8xf32>
    %120 = vector.broadcast %119 : vector<1x8xf32> to vector<16x8xf32>
    %121 = arith.addf %117, %120 : vector<16x8xf32>
    %122 = vector.shape_cast %107 : vector<16x8xf32> to vector<2x8x8xf32>
    %cst_43 = arith.constant 0.353553385 : f32
    %123 = vector.broadcast %cst_43 : f32 to vector<2x8x8xf32>
    %124 = arith.mulf %122, %123 : vector<2x8x8xf32>
    %125 = vector.shape_cast %114 : vector<16x8xf32> to vector<2x8x8xf32>
    %126 = vector.shape_cast %121 : vector<16x8xf32> to vector<2x8x8xf32>
    "tpu.trace_start"() <{level = 10 : i32, message = "bqd,bkd->bqk"}> : () -> ()
    %cst_44 = arith.constant dense<0.000000e+00> : vector<2x8x8xf32>
    %127 = tpu.matmul %124, %125, %cst_44 {dimension_numbers = #tpu.dot_dimension_numbers<[2], [2], [1], [1], [0, 0, 0, 1, 1, 1], [0], [0]>} : vector<2x8x8xf32>, vector<2x8x8xf32>, vector<2x8x8xf32> -> vector<2x8x8xf32>
    "tpu.trace_stop"() : () -> ()
    %cst_45 = arith.constant dense<0xFF800000> : vector<2x8xf32>
    %128 = vector.multi_reduction <maximumf>, %127, %cst_45 [2] : vector<2x8x8xf32> to vector<2x8xf32>
    %129 = vector.shape_cast %128 : vector<2x8xf32> to vector<2x8x1xf32>
    %130 = vector.broadcast %129 : vector<2x8x1xf32> to vector<2x8x8xf32>
    %131 = arith.subf %127, %130 : vector<2x8x8xf32>
    %132 = math.exp %131 : vector<2x8x8xf32>
    %cst_46 = arith.constant dense<0.000000e+00> : vector<2x8xf32>
    %133 = vector.multi_reduction <add>, %132, %cst_46 [2] : vector<2x8x8xf32> to vector<2x8xf32>
    %134 = vector.shape_cast %133 : vector<2x8xf32> to vector<2x8x1xf32>
    %135 = tpu.reciprocal %134 {approx = true} : vector<2x8x1xf32> -> vector<2x8x1xf32>
    %136 = vector.broadcast %135 : vector<2x8x1xf32> to vector<2x8x8xf32>
    %137 = arith.mulf %132, %136 : vector<2x8x8xf32>
    "tpu.trace_start"() <{level = 10 : i32, message = "bqk,bkd->bqd"}> : () -> ()
    %cst_47 = arith.constant dense<0.000000e+00> : vector<2x8x8xf32>
    %138 = tpu.matmul %137, %126, %cst_47 {dimension_numbers = #tpu.dot_dimension_numbers<[2], [1], [1], [2], [0, 0, 0, 1, 1, 2], [0], [0]>} : vector<2x8x8xf32>, vector<2x8x8xf32>, vector<2x8x8xf32> -> vector<2x8x8xf32>
    "tpu.trace_stop"() : () -> ()
    %cst_48 = arith.constant dense<0.000000e+00> : vector<2x8xf32>
    %139 = vector.multi_reduction <add>, %138, %cst_48 [1] : vector<2x8x8xf32> to vector<2x8xf32>
    %cst_49 = arith.constant 1.250000e-01 : f32
    %140 = vector.broadcast %cst_49 : f32 to vector<2x8xf32>
    %141 = arith.mulf %139, %140 : vector<2x8xf32>
    %142 = vector.extract_strided_slice %9 {offsets = [2, 0, 0], sizes = [1, 8, 32], strides = [1, 1, 1]} : vector<4x8x32xf32> to vector<1x8x32xf32>
    %143 = vector.shape_cast %142 : vector<1x8x32xf32> to vector<8x32xf32>
    %cst_50 = arith.constant dense<0.000000e+00> : vector<2x32xf32>
    %144 = tpu.matmul %141, %143, %cst_50 {dimension_numbers = #tpu.dot_dimension_numbers<[1], [0], [0], [1], [0, 0, 1, 1], [], []>} : vector<2x8xf32>, vector<8x32xf32>, vector<2x32xf32> -> vector<2x32xf32>
    %145 = arith.addf %100, %144 : vector<2x32xf32>
    %146 = vector.extract_strided_slice %7 {offsets = [0, 3, 0, 0], sizes = [1, 1, 32, 8], strides = [1, 1, 1, 1]} : vector<3x4x32x8xf32> to vector<1x1x32x8xf32>
    %147 = vector.shape_cast %146 : vector<1x1x32x8xf32> to vector<32x8xf32>
    %cst_51 = arith.constant dense<0.000000e+00> : vector<16x8xf32>
    %148 = tpu.matmul %6, %147, %cst_51 {dimension_numbers = #tpu.dot_dimension_numbers<[1], [0], [0], [1], [0, 0, 1, 1], [], []>} : vector<16x32xf32>, vector<32x8xf32>, vector<16x8xf32> -> vector<16x8xf32>
    %149 = vector.extract_strided_slice %8 {offsets = [0, 3, 0, 0], sizes = [1, 1, 1, 8], strides = [1, 1, 1, 1]} : vector<3x4x1x8xf32> to vector<1x1x1x8xf32>
    %150 = vector.shape_cast %149 : vector<1x1x1x8xf32> to vector<1x8xf32>
    %151 = vector.broadcast %150 : vector<1x8xf32> to vector<16x8xf32>
    %152 = arith.addf %148, %151 : vector<16x8xf32>
    %153 = vector.extract_strided_slice %7 {offsets = [1, 3, 0, 0], sizes = [1, 1, 32, 8], strides = [1, 1, 1, 1]} : vector<3x4x32x8xf32> to vector<1x1x32x8xf32>
    %154 = vector.shape_cast %153 : vector<1x1x32x8xf32> to vector<32x8xf32>
    %cst_52 = arith.constant dense<0.000000e+00> : vector<16x8xf32>
    %155 = tpu.matmul %6, %154, %cst_52 {dimension_numbers = #tpu.dot_dimension_numbers<[1], [0], [0], [1], [0, 0, 1, 1], [], []>} : vector<16x32xf32>, vector<32x8xf32>, vector<16x8xf32> -> vector<16x8xf32>
    %156 = vector.extract_strided_slice %8 {offsets = [1, 3, 0, 0], sizes = [1, 1, 1, 8], strides = [1, 1, 1, 1]} : vector<3x4x1x8xf32> to vector<1x1x1x8xf32>
    %157 = vector.shape_cast %156 : vector<1x1x1x8xf32> to vector<1x8xf32>
    %158 = vector.broadcast %157 : vector<1x8xf32> to vector<16x8xf32>
    %159 = arith.addf %155, %158 : vector<16x8xf32>
    %160 = vector.extract_strided_slice %7 {offsets = [2, 3, 0, 0], sizes = [1, 1, 32, 8], strides = [1, 1, 1, 1]} : vector<3x4x32x8xf32> to vector<1x1x32x8xf32>
    %161 = vector.shape_cast %160 : vector<1x1x32x8xf32> to vector<32x8xf32>
    %cst_53 = arith.constant dense<0.000000e+00> : vector<16x8xf32>
    %162 = tpu.matmul %6, %161, %cst_53 {dimension_numbers = #tpu.dot_dimension_numbers<[1], [0], [0], [1], [0, 0, 1, 1], [], []>} : vector<16x32xf32>, vector<32x8xf32>, vector<16x8xf32> -> vector<16x8xf32>
    %163 = vector.extract_strided_slice %8 {offsets = [2, 3, 0, 0], sizes = [1, 1, 1, 8], strides = [1, 1, 1, 1]} : vector<3x4x1x8xf32> to vector<1x1x1x8xf32>
    %164 = vector.shape_cast %163 : vector<1x1x1x8xf32> to vector<1x8xf32>
    %165 = vector.broadcast %164 : vector<1x8xf32> to vector<16x8xf32>
    %166 = arith.addf %162, %165 : vector<16x8xf32>
    %167 = vector.shape_cast %152 : vector<16x8xf32> to vector<2x8x8xf32>
    %cst_54 = arith.constant 0.353553385 : f32
    %168 = vector.broadcast %cst_54 : f32 to vector<2x8x8xf32>
    %169 = arith.mulf %167, %168 : vector<2x8x8xf32>
    %170 = vector.shape_cast %159 : vector<16x8xf32> to vector<2x8x8xf32>
    %171 = vector.shape_cast %166 : vector<16x8xf32> to vector<2x8x8xf32>
    "tpu.trace_start"() <{level = 10 : i32, message = "bqd,bkd->bqk"}> : () -> ()
    %cst_55 = arith.constant dense<0.000000e+00> : vector<2x8x8xf32>
    %172 = tpu.matmul %169, %170, %cst_55 {dimension_numbers = #tpu.dot_dimension_numbers<[2], [2], [1], [1], [0, 0, 0, 1, 1, 1], [0], [0]>} : vector<2x8x8xf32>, vector<2x8x8xf32>, vector<2x8x8xf32> -> vector<2x8x8xf32>
    "tpu.trace_stop"() : () -> ()
    %cst_56 = arith.constant dense<0xFF800000> : vector<2x8xf32>
    %173 = vector.multi_reduction <maximumf>, %172, %cst_56 [2] : vector<2x8x8xf32> to vector<2x8xf32>
    %174 = vector.shape_cast %173 : vector<2x8xf32> to vector<2x8x1xf32>
    %175 = vector.broadcast %174 : vector<2x8x1xf32> to vector<2x8x8xf32>
    %176 = arith.subf %172, %175 : vector<2x8x8xf32>
    %177 = math.exp %176 : vector<2x8x8xf32>
    %cst_57 = arith.constant dense<0.000000e+00> : vector<2x8xf32>
    %178 = vector.multi_reduction <add>, %177, %cst_57 [2] : vector<2x8x8xf32> to vector<2x8xf32>
    %179 = vector.shape_cast %178 : vector<2x8xf32> to vector<2x8x1xf32>
    %180 = tpu.reciprocal %179 {approx = true} : vector<2x8x1xf32> -> vector<2x8x1xf32>
    %181 = vector.broadcast %180 : vector<2x8x1xf32> to vector<2x8x8xf32>
    %182 = arith.mulf %177, %181 : vector<2x8x8xf32>
    "tpu.trace_start"() <{level = 10 : i32, message = "bqk,bkd->bqd"}> : () -> ()
    %cst_58 = arith.constant dense<0.000000e+00> : vector<2x8x8xf32>
    %183 = tpu.matmul %182, %171, %cst_58 {dimension_numbers = #tpu.dot_dimension_numbers<[2], [1], [1], [2], [0, 0, 0, 1, 1, 2], [0], [0]>} : vector<2x8x8xf32>, vector<2x8x8xf32>, vector<2x8x8xf32> -> vector<2x8x8xf32>
    "tpu.trace_stop"() : () -> ()
    %cst_59 = arith.constant dense<0.000000e+00> : vector<2x8xf32>
    %184 = vector.multi_reduction <add>, %183, %cst_59 [1] : vector<2x8x8xf32> to vector<2x8xf32>
    %cst_60 = arith.constant 1.250000e-01 : f32
    %185 = vector.broadcast %cst_60 : f32 to vector<2x8xf32>
    %186 = arith.mulf %184, %185 : vector<2x8xf32>
    %187 = vector.extract_strided_slice %9 {offsets = [3, 0, 0], sizes = [1, 8, 32], strides = [1, 1, 1]} : vector<4x8x32xf32> to vector<1x8x32xf32>
    %188 = vector.shape_cast %187 : vector<1x8x32xf32> to vector<8x32xf32>
    %cst_61 = arith.constant dense<0.000000e+00> : vector<2x32xf32>
    %189 = tpu.matmul %186, %188, %cst_61 {dimension_numbers = #tpu.dot_dimension_numbers<[1], [0], [0], [1], [0, 0, 1, 1], [], []>} : vector<2x8xf32>, vector<8x32xf32>, vector<2x32xf32> -> vector<2x32xf32>
    %190 = arith.addf %145, %189 : vector<2x32xf32>
    %c0_62 = arith.constant 0 : index
    %c0_63 = arith.constant 0 : index
    %191 = vector.load %arg7[%c0_62, %c0_63] : memref<1x32xf32, #tpu.memory_space<vmem>>, vector<1x32xf32>
    %192 = vector.broadcast %191 : vector<1x32xf32> to vector<2x32xf32>
    %193 = arith.addf %190, %192 : vector<2x32xf32>
    %c0_64 = arith.constant 0 : index
    %c0_65 = arith.constant 0 : index
    %194 = vector.load %arg8[%c0_64, %c0_65] : memref<2x32xf32, #tpu.memory_space<vmem>>, vector<2x32xf32>
    tpu.vector_store %arg8[%c0_64, %c0_65], %193 {strides = array<i32>} : memref<2x32xf32, #tpu.memory_space<vmem>>, vector<2x32xf32>,
    return
  }
  func.func @transform_0(%arg0: i32) -> (i32, i32, i32) {
    %c0_i32 = arith.constant 0 : i32
    %c0_i32_0 = arith.constant 0 : i32
    %c0_i32_1 = arith.constant 0 : i32
    return %arg0, %c0_i32, %c0_i32_0 : i32, i32, i32
  }
  func.func @transform_1(%arg0: i32) -> (i32, i32) {
    %c0_i32 = arith.constant 0 : i32
    %c0_i32_0 = arith.constant 0 : i32
    %c0_i32_1 = arith.constant 0 : i32
    return %c0_i32, %c0_i32_0 : i32, i32
  }
  func.func @transform_2(%arg0: i32) -> (i32, i32) {
    %c0_i32 = arith.constant 0 : i32
    %c0_i32_0 = arith.constant 0 : i32
    %c0_i32_1 = arith.constant 0 : i32
    return %c0_i32, %c0_i32_0 : i32, i32
  }
  func.func @transform_3(%arg0: i32) -> (i32, i32, i32, i32) {
    %c0_i32 = arith.constant 0 : i32
    %c0_i32_0 = arith.constant 0 : i32
    %c0_i32_1 = arith.constant 0 : i32
    %c0_i32_2 = arith.constant 0 : i32
    %c0_i32_3 = arith.constant 0 : i32
    return %c0_i32, %c0_i32_0, %c0_i32_1, %c0_i32_2 : i32, i32, i32, i32
  }
  func.func @transform_4(%arg0: i32) -> (i32, i32, i32, i32) {
    %c0_i32 = arith.constant 0 : i32
    %c0_i32_0 = arith.constant 0 : i32
    %c0_i32_1 = arith.constant 0 : i32
    %c0_i32_2 = arith.constant 0 : i32
    %c0_i32_3 = arith.constant 0 : i32
    return %c0_i32, %c0_i32_0, %c0_i32_1, %c0_i32_2 : i32, i32, i32, i32
  }
  func.func @transform_5(%arg0: i32) -> (i32, i32, i32) {
    %c0_i32 = arith.constant 0 : i32
    %c0_i32_0 = arith.constant 0 : i32
    %c0_i32_1 = arith.constant 0 : i32
    %c0_i32_2 = arith.constant 0 : i32
    return %c0_i32, %c0_i32_0, %c0_i32_1 : i32, i32, i32
  }
  func.func @transform_6(%arg0: i32) -> (i32, i32) {
    %c0_i32 = arith.constant 0 : i32
    %c0_i32_0 = arith.constant 0 : i32
    %c0_i32_1 = arith.constant 0 : i32
    return %c0_i32, %c0_i32_0 : i32, i32
  }
  func.func @transform_7(%arg0: i32) -> (i32, i32) {
    %c0_i32 = arith.constant 0 : i32
    %c0_i32_0 = arith.constant 0 : i32
    return %arg0, %c0_i32 : i32, i32
  }
}

</mosaic_0001>

<llo_original>
// kernel: tpu_custom_call.1
$region0: #{tpu_custom_call.1}
  #allocation0 [shape = 'u32[]', space=smem, size = 0x4, offset = 0x4, fixed_abs, tag = 'smem constant byte address 0x4 - core index']
  #allocation1 [shape = 'u32[72,128]{1,0:T(1,128)}', space=vmem, size = 0x9000, scoped, tag = 'internal scratch']
  %s0 = inlined_call_operand.vmem [shape: f32[2,8,32], index: 0, kind: input, shape index: {}]
  %s1 = inlined_call_operand.vmem [shape: f32[32,32], index: 1, kind: input, shape index: {}]
  %s2 = inlined_call_operand.vmem [shape: f32[1,32], index: 2, kind: input, shape index: {}]
  %s3 = inlined_call_operand.vmem [shape: f32[3,4,32,8], index: 3, kind: input, shape index: {}]
  %s4 = inlined_call_operand.vmem [shape: f32[3,4,1,8], index: 4, kind: input, shape index: {}]
  %s5 = inlined_call_operand.vmem [shape: f32[4,8,32], index: 5, kind: input, shape index: {}]
  %s6 = inlined_call_operand.vmem [shape: f32[1,32], index: 6, kind: input, shape index: {}]
  %s7 = inlined_call_operand.hbm [shape: f32[2,32], index: 7, kind: output, shape index: {}]
  %s8 = sld [smem:[#allocation0]]
  $region38: #{tpu_custom_call.1} parent=0
    _
  %s10 = ssub.s32 1, %s8
  %s11 = scalar_select 0, %s10, %s8
  $region1: #{tpu_custom_call.1} parent=0
    #allocation2 [shape = 'u8[1024]{0}', space=vmem, size = 0x400, scoped, tag = 'output window, operand 0, single buffered']
    #allocation3 [shape = 's32[1]{0}', space=sflag, size = 0x4, scoped, tag = 'scoped memory for tpu_custom_call.1']
    %12 = vsyncpa [#allocation3], 0
    // Predicated region
    $region2: #{tpu_custom_call.1} parent=1 // pred_check
      _
    $region3: #{tpu_custom_call.1} parent=1 // pred_check_branch
      %14 = sbr.rel (0) target = $region5
    $region4: #{tpu_custom_call.1} parent=1 // pred_region
      _
    $region5: #{tpu_custom_call.1} parent=1 // pred_fallthru
      _
    // Predicated region
    $region6: #{tpu_custom_call.1} parent=1 // pred_check
      _
    $region7: #{tpu_custom_call.1} parent=1 // pred_check_branch
      %16 = sbr.rel (0) target = $region9
    $region8: #{tpu_custom_call.1} parent=1 // pred_region
      _
    $region9: #{tpu_custom_call.1} parent=1 // pred_fallthru
      _
    // Predicated region
    $region10: #{tpu_custom_call.1} parent=1 // pred_check
      _
    $region11: #{tpu_custom_call.1} parent=1 // pred_check_branch
      %18 = sbr.rel (0) target = $region13
    $region12: #{tpu_custom_call.1} parent=1 // pred_region
      _
    $region13: #{tpu_custom_call.1} parent=1 // pred_fallthru
      _
    // Predicated region
    $region14: #{tpu_custom_call.1} parent=1 // pred_check
      _
    $region15: #{tpu_custom_call.1} parent=1 // pred_check_branch
      %20 = sbr.rel (0) target = $region17
    $region16: #{tpu_custom_call.1} parent=1 // pred_region
      _
    $region17: #{tpu_custom_call.1} parent=1 // pred_fallthru
      _
    // Predicated region
    $region18: #{tpu_custom_call.1} parent=1 // pred_check
      _
    $region19: #{tpu_custom_call.1} parent=1 // pred_check_branch
      %22 = sbr.rel (0) target = $region21
    $region20: #{tpu_custom_call.1} parent=1 // pred_region
      _
    $region21: #{tpu_custom_call.1} parent=1 // pred_fallthru
      _
    // Predicated region
    $region22: #{tpu_custom_call.1} parent=1 // pred_check
      _
    $region23: #{tpu_custom_call.1} parent=1 // pred_check_branch
      %24 = sbr.rel (0) target = $region25
    $region24: #{tpu_custom_call.1} parent=1 // pred_region
      _
    $region25: #{tpu_custom_call.1} parent=1 // pred_fallthru
      _
    // Predicated region
    $region26: #{tpu_custom_call.1} parent=1 // pred_check
      _
    $region27: #{tpu_custom_call.1} parent=1 // pred_check_branch
      %26 = sbr.rel (0) target = $region29
    $region28: #{tpu_custom_call.1} parent=1 // pred_region
      _
    $region29: #{tpu_custom_call.1} parent=1 // pred_fallthru
      _
    %v27 = vld [vmem:[%s0] sm:$0xff]
    %v28 = vld [vmem:[%s0 + $0x8] sm:$0xff]
    %v29 = vld [vmem:[%s1] sm:$0xff]
    %v30 = vld [vmem:[%s1 + $0x8] sm:$0xff]
    %v31 = vld [vmem:[%s1 + $0x10] sm:$0xff]
    %v32 = vld [vmem:[%s1 + $0x18] sm:$0xff]
    %v33 = vld [vmem:[%s2] sm:$0x1]
    %v35 = vperm.slane %v33, 0
    %vm37 = vcmask 261120
    %v39 = vsel %vm37, %v27, 0
    %v42 = vsel %vm37, %v28, 0
    %44 = vmatpush.msra.mxu0 0.0
    %45 = vmatpush.msra.mxu0 0.0
    %46 = vmatpush.msra.mxu0 0.0
    %47 = vmatpush.msra.mxu0 0.0
    %48 = vmatpush.msra.mxu0 0.0
    %49 = vmatpush.msra.mxu0 0.0
    %50 = vmatpush.msra.mxu0 0.0
    %51 = vmatpush.msra.mxu0 0.0
    %52 = vmatpush.msra.mxu0 0.0
    %53 = vmatpush.msra.mxu0 0.0
    %54 = vmatpush.msra.mxu0 0.0
    %55 = vmatpush.msra.mxu0 0.0
    %56 = vmatpush.msra.mxu0 %v32
    %57 = vmatpush.msra.mxu0 %v31
    %58 = vmatpush.msra.mxu0 %v30
    %59 = vmatpush.msra.mxu0 %v29
    %60 = vmatmul.f32.gmra.mxu0 %v39
    %v61 = vpop.f32.mrf.mxu0
    %v62 = vadd.f32 %v35, %v61
    %63 = vmatmul.f32.gmra.mxu0 %v42
    %v64 = vpop.f32.mrf.mxu0
    %v65 = vadd.f32 %v35, %v64
    %66 = vdwg.mxu0
    %v67 = vld [vmem:[%s3] sm:$0xff]
    %v68 = vld [vmem:[%s3 + $0x8] sm:$0xff]
    %v69 = vld [vmem:[%s3 + $0x10] sm:$0xff]
    %v70 = vld [vmem:[%s3 + $0x18] sm:$0xff]
    %v71 = vld [vmem:[%s3 + $0x20] sm:$0xff]
    %v72 = vld [vmem:[%s3 + $0x28] sm:$0xff]
    %v73 = vld [vmem:[%s3 + $0x30] sm:$0xff]
    %v74 = vld [vmem:[%s3 + $0x38] sm:$0xff]
    %v75 = vld [vmem:[%s3 + $0x40] sm:$0xff]
    %v76 = vld [vmem:[%s3 + $0x48] sm:$0xff]
    %v77 = vld [vmem:[%s3 + $0x50] sm:$0xff]
    %v78 = vld [vmem:[%s3 + $0x58] sm:$0xff]
    %v79 = vld [vmem:[%s3 + $0x60] sm:$0xff]
    %v80 = vld [vmem:[%s3 + $0x68] sm:$0xff]
    %v81 = vld [vmem:[%s3 + $0x70] sm:$0xff]
    %v82 = vld [vmem:[%s3 + $0x78] sm:$0xff]
    %v83 = vld [vmem:[%s3 + $0x80] sm:$0xff]
    %v84 = vld [vmem:[%s3 + $0x88] sm:$0xff]
    %v85 = vld [vmem:[%s3 + $0x90] sm:$0xff]
    %v86 = vld [vmem:[%s3 + $0x98] sm:$0xff]
    %v87 = vld [vmem:[%s3 + $0xa0] sm:$0xff]
    %v88 = vld [vmem:[%s3 + $0xa8] sm:$0xff]
    %v89 = vld [vmem:[%s3 + $0xb0] sm:$0xff]
    %v90 = vld [vmem:[%s3 + $0xb8] sm:$0xff]
    %v91 = vld [vmem:[%s3 + $0xc0] sm:$0xff]
    %v92 = vld [vmem:[%s3 + $0xc8] sm:$0xff]
    %v93 = vld [vmem:[%s3 + $0xd0] sm:$0xff]
    %v94 = vld [vmem:[%s3 + $0xd8] sm:$0xff]
    %v95 = vld [vmem:[%s3 + $0xe0] sm:$0xff]
    %v96 = vld [vmem:[%s3 + $0xe8] sm:$0xff]
    %v97 = vld [vmem:[%s3 + $0xf0] sm:$0xff]
    %v98 = vld [vmem:[%s3 + $0xf8] sm:$0xff]
    %v99 = vld [vmem:[%s3 + $0x100] sm:$0xff]
    %v100 = vld [vmem:[%s3 + $0x108] sm:$0xff]
    %v101 = vld [vmem:[%s3 + $0x110] sm:$0xff]
    %v102 = vld [vmem:[%s3 + $0x118] sm:$0xff]
    %v103 = vld [vmem:[%s3 + $0x120] sm:$0xff]
    %v104 = vld [vmem:[%s3 + $0x128] sm:$0xff]
    %v105 = vld [vmem:[%s3 + $0x130] sm:$0xff]
    %v106 = vld [vmem:[%s3 + $0x138] sm:$0xff]
    %v107 = vld [vmem:[%s3 + $0x140] sm:$0xff]
    %v108 = vld [vmem:[%s3 + $0x148] sm:$0xff]
    %v109 = vld [vmem:[%s3 + $0x150] sm:$0xff]
    %v110 = vld [vmem:[%s3 + $0x158] sm:$0xff]
    %v111 = vld [vmem:[%s3 + $0x160] sm:$0xff]
    %v112 = vld [vmem:[%s3 + $0x168] sm:$0xff]
    %v113 = vld [vmem:[%s3 + $0x170] sm:$0xff]
    %v114 = vld [vmem:[%s3 + $0x178] sm:$0xff]
    %v115 = vld [vmem:[%s4] sm:$0x1]
    %v116 = vld [vmem:[%s4 + $0x1] sm:$0x1]
    %v117 = vld [vmem:[%s4 + $0x2] sm:$0x1]
    %v118 = vld [vmem:[%s4 + $0x3] sm:$0x1]
    %v119 = vld [vmem:[%s4 + $0x4] sm:$0x1]
    %v120 = vld [vmem:[%s4 + $0x5] sm:$0x1]
    %v121 = vld [vmem:[%s4 + $0x6] sm:$0x1]
    %v122 = vld [vmem:[%s4 + $0x7] sm:$0x1]
    %v123 = vld [vmem:[%s4 + $0x8] sm:$0x1]
    %v124 = vld [vmem:[%s4 + $0x9] sm:$0x1]
    %v125 = vld [vmem:[%s4 + $0xa] sm:$0x1]
    %v126 = vld [vmem:[%s4 + $0xb] sm:$0x1]
    %v127 = vld [vmem:[%s5] sm:$0xff]
    %v128 = vld [vmem:[%s5 + $0x8] sm:$0xff]
    %v129 = vld [vmem:[%s5 + $0x10] sm:$0xff]
    %v130 = vld [vmem:[%s5 + $0x18] sm:$0xff]
    %v132 = vperm.slane %v115, 0
    %v135 = vsel %vm37, %v62, 0
    %v138 = vsel %vm37, %v65, 0
    %140 = vmatpush.msra.mxu0 0.0
    %141 = vmatpush.msra.mxu0 0.0
    %142 = vmatpush.msra.mxu0 0.0
    %143 = vmatpush.msra.mxu0 0.0
    %144 = vmatpush.msra.mxu0 0.0
    %145 = vmatpush.msra.mxu0 0.0
    %146 = vmatpush.msra.mxu0 0.0
    %147 = vmatpush.msra.mxu0 0.0
    %148 = vmatpush.msra.mxu0 0.0
    %149 = vmatpush.msra.mxu0 0.0
    %150 = vmatpush.msra.mxu0 0.0
    %151 = vmatpush.msra.mxu0 0.0
    %152 = vmatpush.msra.mxu0 %v70
    %153 = vmatpush.msra.mxu0 %v69
    %154 = vmatpush.msra.mxu0 %v68
    %155 = vmatpush.msra.mxu0 %v67
    %156 = vmatmul.f32.gmra.mxu0 %v135
    %v157 = vpop.f32.mrf.mxu0
    %v158 = vadd.f32 %v132, %v157
    %159 = vmatmul.f32.gmra.mxu0 %v138
    %v160 = vpop.f32.mrf.mxu0
    %v161 = vadd.f32 %v132, %v160
    %162 = vdwg.mxu0
    %v164 = vperm.slane %v119, 0
    %166 = vmatpush.msra.mxu0 0.0
    %167 = vmatpush.msra.mxu0 0.0
    %168 = vmatpush.msra.mxu0 0.0
    %169 = vmatpush.msra.mxu0 0.0
    %170 = vmatpush.msra.mxu0 0.0
    %171 = vmatpush.msra.mxu0 0.0
    %172 = vmatpush.msra.mxu0 0.0
    %173 = vmatpush.msra.mxu0 0.0
    %174 = vmatpush.msra.mxu0 0.0
    %175 = vmatpush.msra.mxu0 0.0
    %176 = vmatpush.msra.mxu0 0.0
    %177 = vmatpush.msra.mxu0 0.0
    %178 = vmatpush.msra.mxu0 %v86
    %179 = vmatpush.msra.mxu0 %v85
    %180 = vmatpush.msra.mxu0 %v84
    %181 = vmatpush.msra.mxu0 %v83
    %182 = vmatmul.f32.gmra.mxu0 %v135
    %v183 = vpop.f32.mrf.mxu0
    %v184 = vadd.f32 %v164, %v183
    %185 = vmatmul.f32.gmra.mxu0 %v138
    %v186 = vpop.f32.mrf.mxu0
    %v187 = vadd.f32 %v164, %v186
    %188 = vdwg.mxu0
    %v190 = vperm.slane %v123, 0
    %192 = vmatpush.msra.mxu0 0.0
    %193 = vmatpush.msra.mxu0 0.0
    %194 = vmatpush.msra.mxu0 0.0
    %195 = vmatpush.msra.mxu0 0.0
    %196 = vmatpush.msra.mxu0 0.0
    %197 = vmatpush.msra.mxu0 0.0
    %198 = vmatpush.msra.mxu0 0.0
    %199 = vmatpush.msra.mxu0 0.0
    %200 = vmatpush.msra.mxu0 0.0
    %201 = vmatpush.msra.mxu0 0.0
    %202 = vmatpush.msra.mxu0 0.0
    %203 = vmatpush.msra.mxu0 0.0
    %204 = vmatpush.msra.mxu0 %v102
    %205 = vmatpush.msra.mxu0 %v101
    %206 = vmatpush.msra.mxu0 %v100
    %207 = vmatpush.msra.mxu0 %v99
    %208 = vmatmul.f32.gmra.mxu0 %v135
    %v209 = vpop.f32.mrf.mxu0
    %v210 = vadd.f32 %v190, %v209
    %211 = vmatmul.f32.gmra.mxu0 %v138
    %v212 = vpop.f32.mrf.mxu0
    %v213 = vadd.f32 %v190, %v212
    %214 = vdwg.mxu0
    %v215 = vmul.f32 %v158, 0.35355338
    %v216 = vmul.f32 %v161, 0.35355338
    %vm217 = vcmask 64512
    %v219 = vsel %vm217, %v215, 0
    %v222 = vsel %vm217, %v184, 0
    %224 = vmatpush.xpose.msra.mxu0 0.0
    %225 = vmatpush.xpose.msra.mxu0 0.0
    %226 = vmatpush.xpose.msra.mxu0 0.0
    %227 = vmatpush.xpose.msra.mxu0 0.0
    %228 = vmatpush.xpose.msra.mxu0 0.0
    %229 = vmatpush.xpose.msra.mxu0 0.0
    %230 = vmatpush.xpose.msra.mxu0 0.0
    %231 = vmatpush.xpose.msra.mxu0 0.0
    %232 = vmatpush.xpose.msra.mxu0 0.0
    %233 = vmatpush.xpose.msra.mxu0 0.0
    %234 = vmatpush.xpose.msra.mxu0 0.0
    %235 = vmatpush.xpose.msra.mxu0 0.0
    %236 = vmatpush.xpose.msra.mxu0 0.0
    %237 = vmatpush.xpose.msra.mxu0 0.0
    %238 = vmatpush.xpose.msra.mxu0 0.0
    %239 = vmatpush.xpose.msra.mxu0 %v222
    %240 = vmatmul.f32.gmra.mxu0 %v219
    %v241 = vpop.f32.mrf.mxu0
    %v242 = vadd.f32 0.0, %v241
    %243 = vdwg.mxu0
    %v245 = vsel %vm217, %v216, 0
    %v248 = vsel %vm217, %v187, 0
    %250 = vmatpush.xpose.msra.mxu0 0.0
    %251 = vmatpush.xpose.msra.mxu0 0.0
    %252 = vmatpush.xpose.msra.mxu0 0.0
    %253 = vmatpush.xpose.msra.mxu0 0.0
    %254 = vmatpush.xpose.msra.mxu0 0.0
    %255 = vmatpush.xpose.msra.mxu0 0.0
    %256 = vmatpush.xpose.msra.mxu0 0.0
    %257 = vmatpush.xpose.msra.mxu0 0.0
    %258 = vmatpush.xpose.msra.mxu0 0.0
    %259 = vmatpush.xpose.msra.mxu0 0.0
    %260 = vmatpush.xpose.msra.mxu0 0.0
    %261 = vmatpush.xpose.msra.mxu0 0.0
    %262 = vmatpush.xpose.msra.mxu0 0.0
    %263 = vmatpush.xpose.msra.mxu0 0.0
    %264 = vmatpush.xpose.msra.mxu0 0.0
    %265 = vmatpush.xpose.msra.mxu0 %v248
    %266 = vmatmul.f32.gmra.mxu0 %v245
    %v267 = vpop.f32.mrf.mxu0
    %v268 = vadd.f32 0.0, %v267
    %269 = vdwg.mxu0
    %v270 = vsel %vm217, %v242, -inf
    %271 = vmax.xlane.f32.xlu0 %v270
    %v272 = vpop.xlane.xlu0 %271
    %v273 = vsel %vm217, %v268, -inf
    %274 = vmax.xlane.f32.xlu0 %v273
    %v275 = vpop.xlane.xlu0 %274
    %v276 = vsub.f32 %v242, %v272
    %v277 = vsub.f32 %v268, %v275
    %v278 = vmul.f32 %v276, 1.442695
    %v279 = vpow.pop %v278
    %v280 = vmul.f32 %v277, 1.442695
    %v281 = vpow.pop %v280
    %v282 = vsel %vm217, %v279, 0.0
    %283 = vadd.xlane.f32.xlu0 %v282
    %v284 = vpop.xlane.xlu0 %283
    %v285 = vsel %vm217, %v281, 0.0
    %286 = vadd.xlane.f32.xlu0 %v285
    %v287 = vpop.xlane.xlu0 %286
    %v288 = vrcp.pop %v284
    %v289 = vrcp.pop %v287
    %v290 = vmul.f32 %v279, %v288
    %v291 = vmul.f32 %v281, %v289
    %v293 = vsel %vm217, %v290, 0
    %295 = vmatpush.msra.mxu0 0.0
    %296 = vmatpush.msra.mxu0 0.0
    %297 = vmatpush.msra.mxu0 0.0
    %298 = vmatpush.msra.mxu0 0.0
    %299 = vmatpush.msra.mxu0 0.0
    %300 = vmatpush.msra.mxu0 0.0
    %301 = vmatpush.msra.mxu0 0.0
    %302 = vmatpush.msra.mxu0 0.0
    %303 = vmatpush.msra.mxu0 0.0
    %304 = vmatpush.msra.mxu0 0.0
    %305 = vmatpush.msra.mxu0 0.0
    %306 = vmatpush.msra.mxu0 0.0
    %307 = vmatpush.msra.mxu0 0.0
    %308 = vmatpush.msra.mxu0 0.0
    %309 = vmatpush.msra.mxu0 0.0
    %310 = vmatpush.msra.mxu0 %v210
    %311 = vmatmul.f32.gmra.mxu0 %v293
    %v312 = vpop.f32.mrf.mxu0
    %v313 = vadd.f32 0.0, %v312
    %314 = vdwg.mxu0
    %v316 = vsel %vm217, %v291, 0
    %318 = vmatpush.msra.mxu0 0.0
    %319 = vmatpush.msra.mxu0 0.0
    %320 = vmatpush.msra.mxu0 0.0
    %321 = vmatpush.msra.mxu0 0.0
    %322 = vmatpush.msra.mxu0 0.0
    %323 = vmatpush.msra.mxu0 0.0
    %324 = vmatpush.msra.mxu0 0.0
    %325 = vmatpush.msra.mxu0 0.0
    %326 = vmatpush.msra.mxu0 0.0
    %327 = vmatpush.msra.mxu0 0.0
    %328 = vmatpush.msra.mxu0 0.0
    %329 = vmatpush.msra.mxu0 0.0
    %330 = vmatpush.msra.mxu0 0.0
    %331 = vmatpush.msra.mxu0 0.0
    %332 = vmatpush.msra.mxu0 0.0
    %333 = vmatpush.msra.mxu0 %v213
    %334 = vmatmul.f32.gmra.mxu0 %v316
    %v335 = vpop.f32.mrf.mxu0
    %v336 = vadd.f32 0.0, %v335
    %337 = vdwg.mxu0
    %v338 = vsel %vm217, %v313, 0.0
    %v339 = vrot.slane %v338, 4
    %v340 = vadd.f32 %v338, %v339
    %v341 = vrot.slane %v340, 2
    %v342 = vadd.f32 %v340, %v341
    %v343 = vrot.slane %v342, 1
    %v344 = vadd.f32 %v342, %v343
    %v345 = vsel %vm217, %v336, 0.0
    %v346 = vrot.slane %v345, 4
    %v347 = vadd.f32 %v345, %v346
    %v348 = vrot.slane %v347, 2
    %v349 = vadd.f32 %v347, %v348
    %v350 = vrot.slane %v349, 1
    %v351 = vadd.f32 %v349, %v350
    %v352 = vmul.f32 %v344, 0.125
    %v353 = vmul.f32 %v351, 0.125
    %v355 = vperm.slane %v116, 0
    %357 = vmatpush.msra.mxu0 0.0
    %358 = vmatpush.msra.mxu0 0.0
    %359 = vmatpush.msra.mxu0 0.0
    %360 = vmatpush.msra.mxu0 0.0
    %361 = vmatpush.msra.mxu0 0.0
    %362 = vmatpush.msra.mxu0 0.0
    %363 = vmatpush.msra.mxu0 0.0
    %364 = vmatpush.msra.mxu0 0.0
    %365 = vmatpush.msra.mxu0 0.0
    %366 = vmatpush.msra.mxu0 0.0
    %367 = vmatpush.msra.mxu0 0.0
    %368 = vmatpush.msra.mxu0 0.0
    %369 = vmatpush.msra.mxu0 %v74
    %370 = vmatpush.msra.mxu0 %v73
    %371 = vmatpush.msra.mxu0 %v72
    %372 = vmatpush.msra.mxu0 %v71
    %373 = vmatmul.f32.gmra.mxu0 %v135
    %v374 = vpop.f32.mrf.mxu0
    %v375 = vadd.f32 %v355, %v374
    %376 = vmatmul.f32.gmra.mxu0 %v138
    %v377 = vpop.f32.mrf.mxu0
    %v378 = vadd.f32 %v355, %v377
    %379 = vdwg.mxu0
    %v381 = vperm.slane %v120, 0
    %383 = vmatpush.msra.mxu0 0.0
    %384 = vmatpush.msra.mxu0 0.0
    %385 = vmatpush.msra.mxu0 0.0
    %386 = vmatpush.msra.mxu0 0.0
    %387 = vmatpush.msra.mxu0 0.0
    %388 = vmatpush.msra.mxu0 0.0
    %389 = vmatpush.msra.mxu0 0.0
    %390 = vmatpush.msra.mxu0 0.0
    %391 = vmatpush.msra.mxu0 0.0
    %392 = vmatpush.msra.mxu0 0.0
    %393 = vmatpush.msra.mxu0 0.0
    %394 = vmatpush.msra.mxu0 0.0
    %395 = vmatpush.msra.mxu0 %v90
    %396 = vmatpush.msra.mxu0 %v89
    %397 = vmatpush.msra.mxu0 %v88
    %398 = vmatpush.msra.mxu0 %v87
    %399 = vmatmul.f32.gmra.mxu0 %v135
    %v400 = vpop.f32.mrf.mxu0
    %v401 = vadd.f32 %v381, %v400
    %402 = vmatmul.f32.gmra.mxu0 %v138
    %v403 = vpop.f32.mrf.mxu0
    %v404 = vadd.f32 %v381, %v403
    %405 = vdwg.mxu0
    %v407 = vperm.slane %v124, 0
    %409 = vmatpush.msra.mxu0 0.0
    %410 = vmatpush.msra.mxu0 0.0
    %411 = vmatpush.msra.mxu0 0.0
    %412 = vmatpush.msra.mxu0 0.0
    %413 = vmatpush.msra.mxu0 0.0
    %414 = vmatpush.msra.mxu0 0.0
    %415 = vmatpush.msra.mxu0 0.0
    %416 = vmatpush.msra.mxu0 0.0
    %417 = vmatpush.msra.mxu0 0.0
    %418 = vmatpush.msra.mxu0 0.0
    %419 = vmatpush.msra.mxu0 0.0
    %420 = vmatpush.msra.mxu0 0.0
    %421 = vmatpush.msra.mxu0 %v106
    %422 = vmatpush.msra.mxu0 %v105
    %423 = vmatpush.msra.mxu0 %v104
    %424 = vmatpush.msra.mxu0 %v103
    %425 = vmatmul.f32.gmra.mxu0 %v135
    %v426 = vpop.f32.mrf.mxu0
    %v427 = vadd.f32 %v407, %v426
    %428 = vmatmul.f32.gmra.mxu0 %v138
    %v429 = vpop.f32.mrf.mxu0
    %v430 = vadd.f32 %v407, %v429
    %431 = vdwg.mxu0
    %v432 = vmul.f32 %v375, 0.35355338
    %v433 = vmul.f32 %v378, 0.35355338
    %v435 = vsel %vm217, %v432, 0
    %v438 = vsel %vm217, %v401, 0
    %440 = vmatpush.xpose.msra.mxu0 0.0
    %441 = vmatpush.xpose.msra.mxu0 0.0
    %442 = vmatpush.xpose.msra.mxu0 0.0
    %443 = vmatpush.xpose.msra.mxu0 0.0
    %444 = vmatpush.xpose.msra.mxu0 0.0
    %445 = vmatpush.xpose.msra.mxu0 0.0
    %446 = vmatpush.xpose.msra.mxu0 0.0
    %447 = vmatpush.xpose.msra.mxu0 0.0
    %448 = vmatpush.xpose.msra.mxu0 0.0
    %449 = vmatpush.xpose.msra.mxu0 0.0
    %450 = vmatpush.xpose.msra.mxu0 0.0
    %451 = vmatpush.xpose.msra.mxu0 0.0
    %452 = vmatpush.xpose.msra.mxu0 0.0
    %453 = vmatpush.xpose.msra.mxu0 0.0
    %454 = vmatpush.xpose.msra.mxu0 0.0
    %455 = vmatpush.xpose.msra.mxu0 %v438
    %456 = vmatmul.f32.gmra.mxu0 %v435
    %v457 = vpop.f32.mrf.mxu0
    %v458 = vadd.f32 0.0, %v457
    %459 = vdwg.mxu0
    %v461 = vsel %vm217, %v433, 0
    %v464 = vsel %vm217, %v404, 0
    %466 = vmatpush.xpose.msra.mxu0 0.0
    %467 = vmatpush.xpose.msra.mxu0 0.0
    %468 = vmatpush.xpose.msra.mxu0 0.0
    %469 = vmatpush.xpose.msra.mxu0 0.0
    %470 = vmatpush.xpose.msra.mxu0 0.0
    %471 = vmatpush.xpose.msra.mxu0 0.0
    %472 = vmatpush.xpose.msra.mxu0 0.0
    %473 = vmatpush.xpose.msra.mxu0 0.0
    %474 = vmatpush.xpose.msra.mxu0 0.0
    %475 = vmatpush.xpose.msra.mxu0 0.0
    %476 = vmatpush.xpose.msra.mxu0 0.0
    %477 = vmatpush.xpose.msra.mxu0 0.0
    %478 = vmatpush.xpose.msra.mxu0 0.0
    %479 = vmatpush.xpose.msra.mxu0 0.0
    %480 = vmatpush.xpose.msra.mxu0 0.0
    %481 = vmatpush.xpose.msra.mxu0 %v464
    %482 = vmatmul.f32.gmra.mxu0 %v461
    %v483 = vpop.f32.mrf.mxu0
    %v484 = vadd.f32 0.0, %v483
    %485 = vdwg.mxu0
    %v486 = vsel %vm217, %v458, -inf
    %487 = vmax.xlane.f32.xlu0 %v486
    %v488 = vpop.xlane.xlu0 %487
    %v489 = vsel %vm217, %v484, -inf
    %490 = vmax.xlane.f32.xlu0 %v489
    %v491 = vpop.xlane.xlu0 %490
    %v492 = vsub.f32 %v458, %v488
    %v493 = vsub.f32 %v484, %v491
    %v494 = vmul.f32 %v492, 1.442695
    %v495 = vpow.pop %v494
    %v496 = vmul.f32 %v493, 1.442695
    %v497 = vpow.pop %v496
    %v498 = vsel %vm217, %v495, 0.0
    %499 = vadd.xlane.f32.xlu0 %v498
    %v500 = vpop.xlane.xlu0 %499
    %v501 = vsel %vm217, %v497, 0.0
    %502 = vadd.xlane.f32.xlu0 %v501
    %v503 = vpop.xlane.xlu0 %502
    %v504 = vrcp.pop %v500
    %v505 = vrcp.pop %v503
    %v506 = vmul.f32 %v495, %v504
    %v507 = vmul.f32 %v497, %v505
    %v509 = vsel %vm217, %v506, 0
    %511 = vmatpush.msra.mxu0 0.0
    %512 = vmatpush.msra.mxu0 0.0
    %513 = vmatpush.msra.mxu0 0.0
    %514 = vmatpush.msra.mxu0 0.0
    %515 = vmatpush.msra.mxu0 0.0
    %516 = vmatpush.msra.mxu0 0.0
    %517 = vmatpush.msra.mxu0 0.0
    %518 = vmatpush.msra.mxu0 0.0
    %519 = vmatpush.msra.mxu0 0.0
    %520 = vmatpush.msra.mxu0 0.0
    %521 = vmatpush.msra.mxu0 0.0
    %522 = vmatpush.msra.mxu0 0.0
    %523 = vmatpush.msra.mxu0 0.0
    %524 = vmatpush.msra.mxu0 0.0
    %525 = vmatpush.msra.mxu0 0.0
    %526 = vmatpush.msra.mxu0 %v427
    %527 = vmatmul.f32.gmra.mxu0 %v509
    %v528 = vpop.f32.mrf.mxu0
    %v529 = vadd.f32 0.0, %v528
    %530 = vdwg.mxu0
    %v532 = vsel %vm217, %v507, 0
    %534 = vmatpush.msra.mxu0 0.0
    %535 = vmatpush.msra.mxu0 0.0
    %536 = vmatpush.msra.mxu0 0.0
    %537 = vmatpush.msra.mxu0 0.0
    %538 = vmatpush.msra.mxu0 0.0
    %539 = vmatpush.msra.mxu0 0.0
    %540 = vmatpush.msra.mxu0 0.0
    %541 = vmatpush.msra.mxu0 0.0
    %542 = vmatpush.msra.mxu0 0.0
    %543 = vmatpush.msra.mxu0 0.0
    %544 = vmatpush.msra.mxu0 0.0
    %545 = vmatpush.msra.mxu0 0.0
    %546 = vmatpush.msra.mxu0 0.0
    %547 = vmatpush.msra.mxu0 0.0
    %548 = vmatpush.msra.mxu0 0.0
    %549 = vmatpush.msra.mxu0 %v430
    %550 = vmatmul.f32.gmra.mxu0 %v532
    %v551 = vpop.f32.mrf.mxu0
    %v552 = vadd.f32 0.0, %v551
    %553 = vdwg.mxu0
    %v554 = vsel %vm217, %v529, 0.0
    %v555 = vrot.slane %v554, 4
    %v556 = vadd.f32 %v554, %v555
    %v557 = vrot.slane %v556, 2
    %v558 = vadd.f32 %v556, %v557
    %v559 = vrot.slane %v558, 1
    %v560 = vadd.f32 %v558, %v559
    %v561 = vsel %vm217, %v552, 0.0
    %v562 = vrot.slane %v561, 4
    %v563 = vadd.f32 %v561, %v562
    %v564 = vrot.slane %v563, 2
    %v565 = vadd.f32 %v563, %v564
    %v566 = vrot.slane %v565, 1
    %v567 = vadd.f32 %v565, %v566
    %v568 = vmul.f32 %v560, 0.125
    %v569 = vmul.f32 %v567, 0.125
    %vm572 = vcmask 1041409
    %v573 = vsel %vm572, %v569, %v568
    %v574 = vsel %vm217, %v573, 0
    %576 = vmatpush.msra.mxu0 0.0
    %577 = vmatpush.msra.mxu0 0.0
    %578 = vmatpush.msra.mxu0 0.0
    %579 = vmatpush.msra.mxu0 0.0
    %580 = vmatpush.msra.mxu0 0.0
    %581 = vmatpush.msra.mxu0 0.0
    %582 = vmatpush.msra.mxu0 0.0
    %583 = vmatpush.msra.mxu0 0.0
    %584 = vmatpush.msra.mxu0 0.0
    %585 = vmatpush.msra.mxu0 0.0
    %586 = vmatpush.msra.mxu0 0.0
    %587 = vmatpush.msra.mxu0 0.0
    %588 = vmatpush.msra.mxu0 0.0
    %589 = vmatpush.msra.mxu0 0.0
    %590 = vmatpush.msra.mxu0 0.0
    %591 = vmatpush.msra.mxu0 %v128
    %592 = vmatmul.f32.gmra.mxu0 %v574
    %v593 = vpop.f32.mrf.mxu0
    %v594 = vadd.f32 0.0, %v593
    %595 = vdwg.mxu0
    %v598 = vsel %vm572, %v353, %v352
    %v599 = vsel %vm217, %v598, 0
    %601 = vmatpush.msra.mxu0 0.0
    %602 = vmatpush.msra.mxu0 0.0
    %603 = vmatpush.msra.mxu0 0.0
    %604 = vmatpush.msra.mxu0 0.0
    %605 = vmatpush.msra.mxu0 0.0
    %606 = vmatpush.msra.mxu0 0.0
    %607 = vmatpush.msra.mxu0 0.0
    %608 = vmatpush.msra.mxu0 0.0
    %609 = vmatpush.msra.mxu0 0.0
    %610 = vmatpush.msra.mxu0 0.0
    %611 = vmatpush.msra.mxu0 0.0
    %612 = vmatpush.msra.mxu0 0.0
    %613 = vmatpush.msra.mxu0 0.0
    %614 = vmatpush.msra.mxu0 0.0
    %615 = vmatpush.msra.mxu0 0.0
    %616 = vmatpush.msra.mxu0 %v127
    %617 = vmatmul.f32.gmra.mxu0 %v599
    %v618 = vpop.f32.mrf.mxu0
    %v619 = vadd.f32 %v594, %v618
    %620 = vdwg.mxu0
    %v622 = vperm.slane %v117, 0
    %624 = vmatpush.msra.mxu0 0.0
    %625 = vmatpush.msra.mxu0 0.0
    %626 = vmatpush.msra.mxu0 0.0
    %627 = vmatpush.msra.mxu0 0.0
    %628 = vmatpush.msra.mxu0 0.0
    %629 = vmatpush.msra.mxu0 0.0
    %630 = vmatpush.msra.mxu0 0.0
    %631 = vmatpush.msra.mxu0 0.0
    %632 = vmatpush.msra.mxu0 0.0
    %633 = vmatpush.msra.mxu0 0.0
    %634 = vmatpush.msra.mxu0 0.0
    %635 = vmatpush.msra.mxu0 0.0
    %636 = vmatpush.msra.mxu0 %v78
    %637 = vmatpush.msra.mxu0 %v77
    %638 = vmatpush.msra.mxu0 %v76
    %639 = vmatpush.msra.mxu0 %v75
    %640 = vmatmul.f32.gmra.mxu0 %v135
    %v641 = vpop.f32.mrf.mxu0
    %v642 = vadd.f32 %v622, %v641
    %643 = vmatmul.f32.gmra.mxu0 %v138
    %v644 = vpop.f32.mrf.mxu0
    %v645 = vadd.f32 %v622, %v644
    %646 = vdwg.mxu0
    %v648 = vperm.slane %v121, 0
    %650 = vmatpush.msra.mxu0 0.0
    %651 = vmatpush.msra.mxu0 0.0
    %652 = vmatpush.msra.mxu0 0.0
    %653 = vmatpush.msra.mxu0 0.0
    %654 = vmatpush.msra.mxu0 0.0
    %655 = vmatpush.msra.mxu0 0.0
    %656 = vmatpush.msra.mxu0 0.0
    %657 = vmatpush.msra.mxu0 0.0
    %658 = vmatpush.msra.mxu0 0.0
    %659 = vmatpush.msra.mxu0 0.0
    %660 = vmatpush.msra.mxu0 0.0
    %661 = vmatpush.msra.mxu0 0.0
    %662 = vmatpush.msra.mxu0 %v94
    %663 = vmatpush.msra.mxu0 %v93
    %664 = vmatpush.msra.mxu0 %v92
    %665 = vmatpush.msra.mxu0 %v91
    %666 = vmatmul.f32.gmra.mxu0 %v135
    %v667 = vpop.f32.mrf.mxu0
    %v668 = vadd.f32 %v648, %v667
    %669 = vmatmul.f32.gmra.mxu0 %v138
    %v670 = vpop.f32.mrf.mxu0
    %v671 = vadd.f32 %v648, %v670
    %672 = vdwg.mxu0
    %v674 = vperm.slane %v125, 0
    %676 = vmatpush.msra.mxu0 0.0
    %677 = vmatpush.msra.mxu0 0.0
    %678 = vmatpush.msra.mxu0 0.0
    %679 = vmatpush.msra.mxu0 0.0
    %680 = vmatpush.msra.mxu0 0.0
    %681 = vmatpush.msra.mxu0 0.0
    %682 = vmatpush.msra.mxu0 0.0
    %683 = vmatpush.msra.mxu0 0.0
    %684 = vmatpush.msra.mxu0 0.0
    %685 = vmatpush.msra.mxu0 0.0
    %686 = vmatpush.msra.mxu0 0.0
    %687 = vmatpush.msra.mxu0 0.0
    %688 = vmatpush.msra.mxu0 %v110
    %689 = vmatpush.msra.mxu0 %v109
    %690 = vmatpush.msra.mxu0 %v108
    %691 = vmatpush.msra.mxu0 %v107
    %692 = vmatmul.f32.gmra.mxu0 %v135
    %v693 = vpop.f32.mrf.mxu0
    %v694 = vadd.f32 %v674, %v693
    %695 = vmatmul.f32.gmra.mxu0 %v138
    %v696 = vpop.f32.mrf.mxu0
    %v697 = vadd.f32 %v674, %v696
    %698 = vdwg.mxu0
    %v699 = vmul.f32 %v642, 0.35355338
    %v700 = vmul.f32 %v645, 0.35355338
    %v702 = vsel %vm217, %v699, 0
    %v705 = vsel %vm217, %v668, 0
    %707 = vmatpush.xpose.msra.mxu0 0.0
    %708 = vmatpush.xpose.msra.mxu0 0.0
    %709 = vmatpush.xpose.msra.mxu0 0.0
    %710 = vmatpush.xpose.msra.mxu0 0.0
    %711 = vmatpush.xpose.msra.mxu0 0.0
    %712 = vmatpush.xpose.msra.mxu0 0.0
    %713 = vmatpush.xpose.msra.mxu0 0.0
    %714 = vmatpush.xpose.msra.mxu0 0.0
    %715 = vmatpush.xpose.msra.mxu0 0.0
    %716 = vmatpush.xpose.msra.mxu0 0.0
    %717 = vmatpush.xpose.msra.mxu0 0.0
    %718 = vmatpush.xpose.msra.mxu0 0.0
    %719 = vmatpush.xpose.msra.mxu0 0.0
    %720 = vmatpush.xpose.msra.mxu0 0.0
    %721 = vmatpush.xpose.msra.mxu0 0.0
    %722 = vmatpush.xpose.msra.mxu0 %v705
    %723 = vmatmul.f32.gmra.mxu0 %v702
    %v724 = vpop.f32.mrf.mxu0
    %v725 = vadd.f32 0.0, %v724
    %726 = vdwg.mxu0
    %v728 = vsel %vm217, %v700, 0
    %v731 = vsel %vm217, %v671, 0
    %733 = vmatpush.xpose.msra.mxu0 0.0
    %734 = vmatpush.xpose.msra.mxu0 0.0
    %735 = vmatpush.xpose.msra.mxu0 0.0
    %736 = vmatpush.xpose.msra.mxu0 0.0
    %737 = vmatpush.xpose.msra.mxu0 0.0
    %738 = vmatpush.xpose.msra.mxu0 0.0
    %739 = vmatpush.xpose.msra.mxu0 0.0
    %740 = vmatpush.xpose.msra.mxu0 0.0
    %741 = vmatpush.xpose.msra.mxu0 0.0
    %742 = vmatpush.xpose.msra.mxu0 0.0
    %743 = vmatpush.xpose.msra.mxu0 0.0
    %744 = vmatpush.xpose.msra.mxu0 0.0
    %745 = vmatpush.xpose.msra.mxu0 0.0
    %746 = vmatpush.xpose.msra.mxu0 0.0
    %747 = vmatpush.xpose.msra.mxu0 0.0
    %748 = vmatpush.xpose.msra.mxu0 %v731
    %749 = vmatmul.f32.gmra.mxu0 %v728
    %v750 = vpop.f32.mrf.mxu0
    %v751 = vadd.f32 0.0, %v750
    %752 = vdwg.mxu0
    %v753 = vsel %vm217, %v725, -inf
    %754 = vmax.xlane.f32.xlu0 %v753
    %v755 = vpop.xlane.xlu0 %754
    %v756 = vsel %vm217, %v751, -inf
    %757 = vmax.xlane.f32.xlu0 %v756
    %v758 = vpop.xlane.xlu0 %757
    %v759 = vsub.f32 %v725, %v755
    %v760 = vsub.f32 %v751, %v758
    %v761 = vmul.f32 %v759, 1.442695
    %v762 = vpow.pop %v761
    %v763 = vmul.f32 %v760, 1.442695
    %v764 = vpow.pop %v763
    %v765 = vsel %vm217, %v762, 0.0
    %766 = vadd.xlane.f32.xlu0 %v765
    %v767 = vpop.xlane.xlu0 %766
    %v768 = vsel %vm217, %v764, 0.0
    %769 = vadd.xlane.f32.xlu0 %v768
    %v770 = vpop.xlane.xlu0 %769
    %v771 = vrcp.pop %v767
    %v772 = vrcp.pop %v770
    %v773 = vmul.f32 %v762, %v771
    %v774 = vmul.f32 %v764, %v772
    %v776 = vsel %vm217, %v773, 0
    %778 = vmatpush.msra.mxu0 0.0
    %779 = vmatpush.msra.mxu0 0.0
    %780 = vmatpush.msra.mxu0 0.0
    %781 = vmatpush.msra.mxu0 0.0
    %782 = vmatpush.msra.mxu0 0.0
    %783 = vmatpush.msra.mxu0 0.0
    %784 = vmatpush.msra.mxu0 0.0
    %785 = vmatpush.msra.mxu0 0.0
    %786 = vmatpush.msra.mxu0 0.0
    %787 = vmatpush.msra.mxu0 0.0
    %788 = vmatpush.msra.mxu0 0.0
    %789 = vmatpush.msra.mxu0 0.0
    %790 = vmatpush.msra.mxu0 0.0
    %791 = vmatpush.msra.mxu0 0.0
    %792 = vmatpush.msra.mxu0 0.0
    %793 = vmatpush.msra.mxu0 %v694
    %794 = vmatmul.f32.gmra.mxu0 %v776
    %v795 = vpop.f32.mrf.mxu0
    %v796 = vadd.f32 0.0, %v795
    %797 = vdwg.mxu0
    %v799 = vsel %vm217, %v774, 0
    %801 = vmatpush.msra.mxu0 0.0
    %802 = vmatpush.msra.mxu0 0.0
    %803 = vmatpush.msra.mxu0 0.0
    %804 = vmatpush.msra.mxu0 0.0
    %805 = vmatpush.msra.mxu0 0.0
    %806 = vmatpush.msra.mxu0 0.0
    %807 = vmatpush.msra.mxu0 0.0
    %808 = vmatpush.msra.mxu0 0.0
    %809 = vmatpush.msra.mxu0 0.0
    %810 = vmatpush.msra.mxu0 0.0
    %811 = vmatpush.msra.mxu0 0.0
    %812 = vmatpush.msra.mxu0 0.0
    %813 = vmatpush.msra.mxu0 0.0
    %814 = vmatpush.msra.mxu0 0.0
    %815 = vmatpush.msra.mxu0 0.0
    %816 = vmatpush.msra.mxu0 %v697
    %817 = vmatmul.f32.gmra.mxu0 %v799
    %v818 = vpop.f32.mrf.mxu0
    %v819 = vadd.f32 0.0, %v818
    %820 = vdwg.mxu0
    %v821 = vsel %vm217, %v796, 0.0
    %v822 = vrot.slane %v821, 4
    %v823 = vadd.f32 %v821, %v822
    %v824 = vrot.slane %v823, 2
    %v825 = vadd.f32 %v823, %v824
    %v826 = vrot.slane %v825, 1
    %v827 = vadd.f32 %v825, %v826
    %v828 = vsel %vm217, %v819, 0.0
    %v829 = vrot.slane %v828, 4
    %v830 = vadd.f32 %v828, %v829
    %v831 = vrot.slane %v830, 2
    %v832 = vadd.f32 %v830, %v831
    %v833 = vrot.slane %v832, 1
    %v834 = vadd.f32 %v832, %v833
    %v835 = vmul.f32 %v827, 0.125
    %v836 = vmul.f32 %v834, 0.125
    %v839 = vsel %vm572, %v836, %v835
    %v840 = vsel %vm217, %v839, 0
    %842 = vmatpush.msra.mxu0 0.0
    %843 = vmatpush.msra.mxu0 0.0
    %844 = vmatpush.msra.mxu0 0.0
    %845 = vmatpush.msra.mxu0 0.0
    %846 = vmatpush.msra.mxu0 0.0
    %847 = vmatpush.msra.mxu0 0.0
    %848 = vmatpush.msra.mxu0 0.0
    %849 = vmatpush.msra.mxu0 0.0
    %850 = vmatpush.msra.mxu0 0.0
    %851 = vmatpush.msra.mxu0 0.0
    %852 = vmatpush.msra.mxu0 0.0
    %853 = vmatpush.msra.mxu0 0.0
    %854 = vmatpush.msra.mxu0 0.0
    %855 = vmatpush.msra.mxu0 0.0
    %856 = vmatpush.msra.mxu0 0.0
    %857 = vmatpush.msra.mxu0 %v129
    %858 = vmatmul.f32.gmra.mxu0 %v840
    %v859 = vpop.f32.mrf.mxu0
    %v860 = vadd.f32 0.0, %v859
    %861 = vdwg.mxu0
    %v862 = vadd.f32 %v619, %v860
    %v864 = vperm.slane %v118, 0
    %866 = vmatpush.msra.mxu0 0.0
    %867 = vmatpush.msra.mxu0 0.0
    %868 = vmatpush.msra.mxu0 0.0
    %869 = vmatpush.msra.mxu0 0.0
    %870 = vmatpush.msra.mxu0 0.0
    %871 = vmatpush.msra.mxu0 0.0
    %872 = vmatpush.msra.mxu0 0.0
    %873 = vmatpush.msra.mxu0 0.0
    %874 = vmatpush.msra.mxu0 0.0
    %875 = vmatpush.msra.mxu0 0.0
    %876 = vmatpush.msra.mxu0 0.0
    %877 = vmatpush.msra.mxu0 0.0
    %878 = vmatpush.msra.mxu0 %v82
    %879 = vmatpush.msra.mxu0 %v81
    %880 = vmatpush.msra.mxu0 %v80
    %881 = vmatpush.msra.mxu0 %v79
    %882 = vmatmul.f32.gmra.mxu0 %v135
    %v883 = vpop.f32.mrf.mxu0
    %v884 = vadd.f32 %v864, %v883
    %885 = vmatmul.f32.gmra.mxu0 %v138
    %v886 = vpop.f32.mrf.mxu0
    %v887 = vadd.f32 %v864, %v886
    %888 = vdwg.mxu0
    %v890 = vperm.slane %v122, 0
    %892 = vmatpush.msra.mxu0 0.0
    %893 = vmatpush.msra.mxu0 0.0
    %894 = vmatpush.msra.mxu0 0.0
    %895 = vmatpush.msra.mxu0 0.0
    %896 = vmatpush.msra.mxu0 0.0
    %897 = vmatpush.msra.mxu0 0.0
    %898 = vmatpush.msra.mxu0 0.0
    %899 = vmatpush.msra.mxu0 0.0
    %900 = vmatpush.msra.mxu0 0.0
    %901 = vmatpush.msra.mxu0 0.0
    %902 = vmatpush.msra.mxu0 0.0
    %903 = vmatpush.msra.mxu0 0.0
    %904 = vmatpush.msra.mxu0 %v98
    %905 = vmatpush.msra.mxu0 %v97
    %906 = vmatpush.msra.mxu0 %v96
    %907 = vmatpush.msra.mxu0 %v95
    %908 = vmatmul.f32.gmra.mxu0 %v135
    %v909 = vpop.f32.mrf.mxu0
    %v910 = vadd.f32 %v890, %v909
    %911 = vmatmul.f32.gmra.mxu0 %v138
    %v912 = vpop.f32.mrf.mxu0
    %v913 = vadd.f32 %v890, %v912
    %914 = vdwg.mxu0
    %v916 = vperm.slane %v126, 0
    %918 = vmatpush.msra.mxu0 0.0
    %919 = vmatpush.msra.mxu0 0.0
    %920 = vmatpush.msra.mxu0 0.0
    %921 = vmatpush.msra.mxu0 0.0
    %922 = vmatpush.msra.mxu0 0.0
    %923 = vmatpush.msra.mxu0 0.0
    %924 = vmatpush.msra.mxu0 0.0
    %925 = vmatpush.msra.mxu0 0.0
    %926 = vmatpush.msra.mxu0 0.0
    %927 = vmatpush.msra.mxu0 0.0
    %928 = vmatpush.msra.mxu0 0.0
    %929 = vmatpush.msra.mxu0 0.0
    %930 = vmatpush.msra.mxu0 %v114
    %931 = vmatpush.msra.mxu0 %v113
    %932 = vmatpush.msra.mxu0 %v112
    %933 = vmatpush.msra.mxu0 %v111
    %934 = vmatmul.f32.gmra.mxu0 %v135
    %v935 = vpop.f32.mrf.mxu0
    %v936 = vadd.f32 %v916, %v935
    %937 = vmatmul.f32.gmra.mxu0 %v138
    %v938 = vpop.f32.mrf.mxu0
    %v939 = vadd.f32 %v916, %v938
    %940 = vdwg.mxu0
    %v941 = vmul.f32 %v884, 0.35355338
    %v942 = vmul.f32 %v887, 0.35355338
    %v944 = vsel %vm217, %v941, 0
    %v947 = vsel %vm217, %v910, 0
    %949 = vmatpush.xpose.msra.mxu0 0.0
    %950 = vmatpush.xpose.msra.mxu0 0.0
    %951 = vmatpush.xpose.msra.mxu0 0.0
    %952 = vmatpush.xpose.msra.mxu0 0.0
    %953 = vmatpush.xpose.msra.mxu0 0.0
    %954 = vmatpush.xpose.msra.mxu0 0.0
    %955 = vmatpush.xpose.msra.mxu0 0.0
    %956 = vmatpush.xpose.msra.mxu0 0.0
    %957 = vmatpush.xpose.msra.mxu0 0.0
    %958 = vmatpush.xpose.msra.mxu0 0.0
    %959 = vmatpush.xpose.msra.mxu0 0.0
    %960 = vmatpush.xpose.msra.mxu0 0.0
    %961 = vmatpush.xpose.msra.mxu0 0.0
    %962 = vmatpush.xpose.msra.mxu0 0.0
    %963 = vmatpush.xpose.msra.mxu0 0.0
    %964 = vmatpush.xpose.msra.mxu0 %v947
    %965 = vmatmul.f32.gmra.mxu0 %v944
    %v966 = vpop.f32.mrf.mxu0
    %v967 = vadd.f32 0.0, %v966
    %968 = vdwg.mxu0
    %v970 = vsel %vm217, %v942, 0
    %v973 = vsel %vm217, %v913, 0
    %975 = vmatpush.xpose.msra.mxu0 0.0
    %976 = vmatpush.xpose.msra.mxu0 0.0
    %977 = vmatpush.xpose.msra.mxu0 0.0
    %978 = vmatpush.xpose.msra.mxu0 0.0
    %979 = vmatpush.xpose.msra.mxu0 0.0
    %980 = vmatpush.xpose.msra.mxu0 0.0
    %981 = vmatpush.xpose.msra.mxu0 0.0
    %982 = vmatpush.xpose.msra.mxu0 0.0
    %983 = vmatpush.xpose.msra.mxu0 0.0
    %984 = vmatpush.xpose.msra.mxu0 0.0
    %985 = vmatpush.xpose.msra.mxu0 0.0
    %986 = vmatpush.xpose.msra.mxu0 0.0
    %987 = vmatpush.xpose.msra.mxu0 0.0
    %988 = vmatpush.xpose.msra.mxu0 0.0
    %989 = vmatpush.xpose.msra.mxu0 0.0
    %990 = vmatpush.xpose.msra.mxu0 %v973
    %991 = vmatmul.f32.gmra.mxu0 %v970
    %v992 = vpop.f32.mrf.mxu0
    %v993 = vadd.f32 0.0, %v992
    %994 = vdwg.mxu0
    %v995 = vsel %vm217, %v967, -inf
    %996 = vmax.xlane.f32.xlu0 %v995
    %v997 = vpop.xlane.xlu0 %996
    %v998 = vsel %vm217, %v993, -inf
    %999 = vmax.xlane.f32.xlu0 %v998
    %v1000 = vpop.xlane.xlu0 %999
    %v1001 = vsub.f32 %v967, %v997
    %v1002 = vsub.f32 %v993, %v1000
    %v1003 = vmul.f32 %v1001, 1.442695
    %v1004 = vpow.pop %v1003
    %v1005 = vmul.f32 %v1002, 1.442695
    %v1006 = vpow.pop %v1005
    %v1007 = vsel %vm217, %v1004, 0.0
    %1008 = vadd.xlane.f32.xlu0 %v1007
    %v1009 = vpop.xlane.xlu0 %1008
    %v1010 = vsel %vm217, %v1006, 0.0
    %1011 = vadd.xlane.f32.xlu0 %v1010
    %v1012 = vpop.xlane.xlu0 %1011
    %v1013 = vrcp.pop %v1009
    %v1014 = vrcp.pop %v1012
    %v1015 = vmul.f32 %v1004, %v1013
    %v1016 = vmul.f32 %v1006, %v1014
    %v1018 = vsel %vm217, %v1015, 0
    %1020 = vmatpush.msra.mxu0 0.0
    %1021 = vmatpush.msra.mxu0 0.0
    %1022 = vmatpush.msra.mxu0 0.0
    %1023 = vmatpush.msra.mxu0 0.0
    %1024 = vmatpush.msra.mxu0 0.0
    %1025 = vmatpush.msra.mxu0 0.0
    %1026 = vmatpush.msra.mxu0 0.0
    %1027 = vmatpush.msra.mxu0 0.0
    %1028 = vmatpush.msra.mxu0 0.0
    %1029 = vmatpush.msra.mxu0 0.0
    %1030 = vmatpush.msra.mxu0 0.0
    %1031 = vmatpush.msra.mxu0 0.0
    %1032 = vmatpush.msra.mxu0 0.0
    %1033 = vmatpush.msra.mxu0 0.0
    %1034 = vmatpush.msra.mxu0 0.0
    %1035 = vmatpush.msra.mxu0 %v936
    %1036 = vmatmul.f32.gmra.mxu0 %v1018
    %v1037 = vpop.f32.mrf.mxu0
    %v1038 = vadd.f32 0.0, %v1037
    %1039 = vdwg.mxu0
    %v1041 = vsel %vm217, %v1016, 0
    %1043 = vmatpush.msra.mxu0 0.0
    %1044 = vmatpush.msra.mxu0 0.0
    %1045 = vmatpush.msra.mxu0 0.0
    %1046 = vmatpush.msra.mxu0 0.0
    %1047 = vmatpush.msra.mxu0 0.0
    %1048 = vmatpush.msra.mxu0 0.0
    %1049 = vmatpush.msra.mxu0 0.0
    %1050 = vmatpush.msra.mxu0 0.0
    %1051 = vmatpush.msra.mxu0 0.0
    %1052 = vmatpush.msra.mxu0 0.0
    %1053 = vmatpush.msra.mxu0 0.0
    %1054 = vmatpush.msra.mxu0 0.0
    %1055 = vmatpush.msra.mxu0 0.0
    %1056 = vmatpush.msra.mxu0 0.0
    %1057 = vmatpush.msra.mxu0 0.0
    %1058 = vmatpush.msra.mxu0 %v939
    %1059 = vmatmul.f32.gmra.mxu0 %v1041
    %v1060 = vpop.f32.mrf.mxu0
    %v1061 = vadd.f32 0.0, %v1060
    %1062 = vdwg.mxu0
    %v1063 = vsel %vm217, %v1038, 0.0
    %v1064 = vrot.slane %v1063, 4
    %v1065 = vadd.f32 %v1063, %v1064
    %v1066 = vrot.slane %v1065, 2
    %v1067 = vadd.f32 %v1065, %v1066
    %v1068 = vrot.slane %v1067, 1
    %v1069 = vadd.f32 %v1067, %v1068
    %v1070 = vsel %vm217, %v1061, 0.0
    %v1071 = vrot.slane %v1070, 4
    %v1072 = vadd.f32 %v1070, %v1071
    %v1073 = vrot.slane %v1072, 2
    %v1074 = vadd.f32 %v1072, %v1073
    %v1075 = vrot.slane %v1074, 1
    %v1076 = vadd.f32 %v1074, %v1075
    %v1077 = vmul.f32 %v1069, 0.125
    %v1078 = vmul.f32 %v1076, 0.125
    %v1081 = vsel %vm572, %v1078, %v1077
    %v1082 = vsel %vm217, %v1081, 0
    %1084 = vmatpush.msra.mxu0 0.0
    %1085 = vmatpush.msra.mxu0 0.0
    %1086 = vmatpush.msra.mxu0 0.0
    %1087 = vmatpush.msra.mxu0 0.0
    %1088 = vmatpush.msra.mxu0 0.0
    %1089 = vmatpush.msra.mxu0 0.0
    %1090 = vmatpush.msra.mxu0 0.0
    %1091 = vmatpush.msra.mxu0 0.0
    %1092 = vmatpush.msra.mxu0 0.0
    %1093 = vmatpush.msra.mxu0 0.0
    %1094 = vmatpush.msra.mxu0 0.0
    %1095 = vmatpush.msra.mxu0 0.0
    %1096 = vmatpush.msra.mxu0 0.0
    %1097 = vmatpush.msra.mxu0 0.0
    %1098 = vmatpush.msra.mxu0 0.0
    %1099 = vmatpush.msra.mxu0 %v130
    %1100 = vmatmul.f32.gmra.mxu0 %v1082
    %v1101 = vpop.f32.mrf.mxu0
    %v1102 = vadd.f32 0.0, %v1101
    %1103 = vdwg.mxu0
    %v1104 = vadd.f32 %v862, %v1102
    %v1105 = vld [vmem:[%s6] sm:$0x1]
    %v1107 = vperm.slane %v1105, 0
    %v1109 = vadd.f32 %v1104, %v1107
    %vm1110 = vcmask 254976
    %1111 = vst.msk [vmem:[#allocation2] sm:$0x3] %vm1110, %v1109
    // Predicated region
    $region30: #{tpu_custom_call.1} parent=1 // pred_check
      _
    $region31: #{tpu_custom_call.1} parent=1 // pred_check_branch
      %1113 = sbr.rel (0) target = $region33
    $region32: #{tpu_custom_call.1} parent=1 // pred_region
      %1115 = vsyncadd [#allocation3], 0
      %s1117 = sshll.u32 [#allocation2], 4
      %s1118 = int_to_ptr.vmem [resolvable:$true] %s1117
      %s1119 = sshll.u32 %s7, 4
      %s1120 = int_to_ptr.hbm [resolvable:$true] %s1119
      %1122 = dma.vmem_to_hbm [thread:$0]  %s1118, 32, %s1120, [#allocation3]
    $region33: #{tpu_custom_call.1} parent=1 // pred_fallthru
      _
    // Predicated region
    $region34: #{tpu_custom_call.1} parent=1 // pred_check
      _
    $region35: #{tpu_custom_call.1} parent=1 // pred_check_branch
      %1124 = sbr.rel (0) target = $region37
    $region36: #{tpu_custom_call.1} parent=1 // pred_region
      %1126 = dma.done [#allocation3], 32
    $region37: #{tpu_custom_call.1} parent=1 // pred_fallthru
      _
    %1127 = vsyncpa [#allocation3], 1

</llo_original>
